<compile_context>
chip_gen: v7x
topology: tpu7x:2x2x1
jax: 0.10.0
libtpu: 0.0.40
codegen_flags: <defaults>
</compile_context>

<pallas_src>
import math
import numpy as np
import jax
import jax.numpy as jnp
from jax import lax
from jax.experimental import pallas as pl
from jax.experimental.pallas import tpu as pltpu  # noqa: F401  (kept for CompilerParams when scaled up)

# ---- model hyperparameters (small, consistent with the module) ----
B = 2            # batch
T = 8            # sequence length (block_size)
C = 32           # n_embd
N_HEAD = 4       # n_head
HEAD_D = C // N_HEAD
BT = B * T       # folded batch*sequence rows
EPS = 1e-5
NEG_BIG = -1e30  # finite mask bias (avoids (-inf)-(-inf) NaNs if T is ever tiled)


def block_kernel(x_ref, mask_ref,
                 ln1g_ref, ln1b_ref,
                 wqkv_ref, bqkv_ref,
                 wproj_ref, bproj_ref,
                 ln2g_ref, ln2b_ref,
                 wfc_ref, bfc_ref,
                 wmp_ref, bmp_ref,
                 out_ref):
    x = x_ref[...]                                    # (BT, C) -- batch folded into rows

    def layernorm(v, g, b):
        mu = jnp.mean(v, axis=-1, keepdims=True)
        var = jnp.mean((v - mu) ** 2, axis=-1, keepdims=True)
        return (v - mu) * lax.rsqrt(var + EPS) * g + b

    # ---- attention branch ----
    ln1 = layernorm(x, ln1g_ref[...], ln1b_ref[...])                    # (BT, C)
    # weights arrive pre-transposed (in, out); 1/sqrt(D) already folded into q columns/bias
    qkv = jnp.dot(ln1, wqkv_ref[...],
                  preferred_element_type=jnp.float32) + bqkv_ref[...]   # (BT, 3C)

    mask_bias = mask_ref[...]   # (BT, BT) precomputed block-diagonal causal additive bias

    ys = []
    for h in range(N_HEAD):                                             # static loop over heads
        qh = qkv[:, h * HEAD_D:(h + 1) * HEAD_D]                        # (BT, D)
        kh = qkv[:, C + h * HEAD_D: C + (h + 1) * HEAD_D]               # (BT, D)
        vh = qkv[:, 2 * C + h * HEAD_D: 2 * C + (h + 1) * HEAD_D]       # (BT, D)

        # q @ k^T via dot_general (no explicit transpose materialization); scale pre-folded
        s = lax.dot_general(qh, kh, (((1,), (1,)), ((), ())),
                            preferred_element_type=jnp.float32)         # (BT, BT)
        s = s + mask_bias
        s = s - jnp.max(s, axis=-1, keepdims=True)
        p = jnp.exp(s)
        p = p * pl.reciprocal(jnp.sum(p, axis=-1, keepdims=True), approx=True)  # softmax (EUP recip)

        ys.append(jnp.dot(p, vh, preferred_element_type=jnp.float32))   # (BT, D)

    # lane concatenate (XLU/VPU slot, idle here) so the output projection is ONE MXU push
    y = jnp.concatenate(ys, axis=-1)                                     # (BT, C)
    x1 = x + jnp.dot(y, wproj_ref[...],
                     preferred_element_type=jnp.float32) + bproj_ref[...]  # residual 1

    # ---- MLP branch ----
    ln2 = layernorm(x1, ln2g_ref[...], ln2b_ref[...])
    hpre = jnp.dot(ln2, wfc_ref[...],
                   preferred_element_type=jnp.float32) + bfc_ref[...]    # (BT, 4C)
    # NewGELU (tanh approximation, exactly as in the reference)
    hact = 0.5 * hpre * (1.0 + jnp.tanh(
        math.sqrt(2.0 / math.pi) * (hpre + 0.044715 * hpre * hpre * hpre)))
    mlp_out = jnp.dot(hact, wmp_ref[...],
                      preferred_element_type=jnp.float32) + bmp_ref[...]

    # TODO(synk): at real sizes, present a lane-dense (multiple-of-128 last dim) output slab
    # via wrapper-side plumbing; at C=32 the in-kernel relayout costs more than the masked
    # vst it would save.
    out_ref[...] = x1 + mlp_out                                          # residual 2


def prepare_params(params):
    """ONE-TIME parameter transform (call outside the per-step path).

    - transpose every linear weight to (in_features, out_features)
    - fold the 1/sqrt(head_dim) attention scale into the q columns of w_qkv / b_qkv
    - build the block-diagonal causal mask bias over the folded (B*T) rows
    """
    (ln1_g, ln1_b, w_qkv, b_qkv, w_proj, b_proj,
     ln2_g, ln2_b, w_fc, b_fc, w_mp, b_mp) = params

    scale = 1.0 / math.sqrt(HEAD_D)
    col_scale = jnp.concatenate([jnp.full((C,), scale, jnp.float32),
                                 jnp.ones((2 * C,), jnp.float32)])       # scale only q outputs
    w_qkv_t = w_qkv.T * col_scale[None, :]                               # (C, 3C)
    b_qkv_s = b_qkv * col_scale[None, :]                                 # (1, 3C)

    # block-diagonal causal mask: row i=(b_i,t_i) attends to col j=(b_j,t_j)
    # iff b_i == b_j and t_j <= t_i  (the module's tril `bias` buffer, batched)
    row = np.arange(BT)[:, None]
    col = np.arange(BT)[None, :]
    allowed = (row // T == col // T) & (col <= row)
    mask_bias = jnp.asarray(np.where(allowed, 0.0, NEG_BIG), jnp.float32)  # (BT, BT)

    return (mask_bias,
            ln1_g, ln1_b,
            w_qkv_t, b_qkv_s,
            w_proj.T, b_proj,
            ln2_g, ln2_b,
            w_fc.T, b_fc,
            w_mp.T, b_mp)


@jax.jit
def gpt_block(x, prepped):
    """x: (B, T, C) float32, prepped = prepare_params(pytorch_layout_params)."""
    b, t, c = x.shape
    x2 = x.reshape(b * t, c)                 # fold batch into rows (free reshape)

    # No grid: a single kernel invocation, all operands resident in VMEM (tiny sizes).
    # If scaled to real GPT sizes: tile the row axis via BlockSpec, mark it "parallel"
    # (megacore / v7x dual-TC), and set vmem_limit_bytes (v7x VMEM is 64 MiB, not 128).
    out2 = pl.pallas_call(
        block_kernel,
        out_shape=jax.ShapeDtypeStruct((b * t, c), jnp.float32),
    )(x2, *prepped)
    return out2.reshape(b, t, c)


def init_params(key):
    ks = jax.random.split(key, 8)
    std = 0.02
    ln1_g = jnp.ones((1, C), jnp.float32)
    ln1_b = jnp.zeros((1, C), jnp.float32)
    w_qkv = std * jax.random.normal(ks[0], (3 * C, C), jnp.float32)     # PyTorch (out, in)
    b_qkv = std * jax.random.normal(ks[1], (1, 3 * C), jnp.float32)
    w_proj = std * jax.random.normal(ks[2], (C, C), jnp.float32)
    b_proj = std * jax.random.normal(ks[3], (1, C), jnp.float32)
    ln2_g = jnp.ones((1, C), jnp.float32)
    ln2_b = jnp.zeros((1, C), jnp.float32)
    w_fc = std * jax.random.normal(ks[4], (4 * C, C), jnp.float32)
    b_fc = std * jax.random.normal(ks[5], (1, 4 * C), jnp.float32)
    w_mp = std * jax.random.normal(ks[6], (C, 4 * C), jnp.float32)
    b_mp = std * jax.random.normal(ks[7], (1, C), jnp.float32)
    return (ln1_g, ln1_b, w_qkv, b_qkv, w_proj, b_proj,
            ln2_g, ln2_b, w_fc, b_fc, w_mp, b_mp)


def gpt_block_ref(x, params):
    """Pure-JAX reference (PyTorch semantics, original parameter layout)."""
    (ln1_g, ln1_b, w_qkv, b_qkv, w_proj, b_proj,
     ln2_g, ln2_b, w_fc, b_fc, w_mp, b_mp) = params

    def ln(v, g, b):
        mu = jnp.mean(v, axis=-1, keepdims=True)
        var = jnp.mean((v - mu) ** 2, axis=-1, keepdims=True)
        return (v - mu) / jnp.sqrt(var + EPS) * g[0] + b[0]

    h = ln(x, ln1_g, ln1_b)
    qkv = h @ w_qkv.T + b_qkv[0]
    q, k, v = jnp.split(qkv, 3, axis=-1)
    q = q.reshape(B, T, N_HEAD, HEAD_D).transpose(0, 2, 1, 3)
    k = k.reshape(B, T, N_HEAD, HEAD_D).transpose(0, 2, 1, 3)
    v = v.reshape(B, T, N_HEAD, HEAD_D).transpose(0, 2, 1, 3)
    att = (q @ k.transpose(0, 1, 3, 2)) / math.sqrt(HEAD_D)
    mask = jnp.tril(jnp.ones((T, T), bool))
    att = jnp.where(mask[None, None], att, -jnp.inf)
    att = jax.nn.softmax(att, axis=-1)
    y = (att @ v).transpose(0, 2, 1, 3).reshape(B, T, C)
    x1 = x + (y @ w_proj.T + b_proj[0])

    h2 = ln(x1, ln2_g, ln2_b)
    f = h2 @ w_fc.T + b_fc[0]
    f = 0.5 * f * (1.0 + jnp.tanh(math.sqrt(2.0 / math.pi) * (f + 0.044715 * f ** 3)))
    return x1 + (f @ w_mp.T + b_mp[0])


if __name__ == "__main__":
    key = jax.random.PRNGKey(0)
    k_x, k_p = jax.random.split(key)
    x = jax.random.normal(k_x, (B, T, C), jnp.float32)
    params = init_params(k_p)

    # One-time parameter prep (transposes / scale folding / mask) OUTSIDE the call path.
    prepped = jax.block_until_ready(prepare_params(params))

    out = gpt_block(x, prepped)
    out = jax.block_until_ready(out)

    ref = gpt_block_ref(x, params)
    assert out.shape == (B, T, C)
    assert jnp.allclose(out, ref, rtol=1e-3, atol=1e-3), "mismatch vs pure-JAX reference"

    print("KERNEL_OK")
</pallas_src>

<mosaic_0001>
module attributes {stable_mosaic.version = 11 : i64} {
  func.func @block_kernel(%arg0: memref<16x32xf32, #tpu.memory_space<vmem>>, %arg1: memref<16x16xf32, #tpu.memory_space<vmem>>, %arg2: memref<1x32xf32, #tpu.memory_space<vmem>>, %arg3: memref<1x32xf32, #tpu.memory_space<vmem>>, %arg4: memref<32x96xf32, #tpu.memory_space<vmem>>, %arg5: memref<1x96xf32, #tpu.memory_space<vmem>>, %arg6: memref<32x32xf32, #tpu.memory_space<vmem>>, %arg7: memref<1x32xf32, #tpu.memory_space<vmem>>, %arg8: memref<1x32xf32, #tpu.memory_space<vmem>>, %arg9: memref<1x32xf32, #tpu.memory_space<vmem>>, %arg10: memref<32x128xf32, #tpu.memory_space<vmem>>, %arg11: memref<1x128xf32, #tpu.memory_space<vmem>>, %arg12: memref<128x32xf32, #tpu.memory_space<vmem>>, %arg13: memref<1x32xf32, #tpu.memory_space<vmem>>, %arg14: memref<16x32xf32, #tpu.memory_space<vmem>>) attributes {dimension_semantics = [], scalar_prefetch = 0 : i64, scratch_operands = 0 : i64, tpu.core_type = #tpu.core_type<tc>} {
    %c0 = arith.constant 0 : index
    %c0_0 = arith.constant 0 : index
    %0 = vector.load %arg0[%c0, %c0_0] : memref<16x32xf32, #tpu.memory_space<vmem>>, vector<16x32xf32>
    %c0_1 = arith.constant 0 : index
    %c0_2 = arith.constant 0 : index
    %1 = vector.load %arg2[%c0_1, %c0_2] : memref<1x32xf32, #tpu.memory_space<vmem>>, vector<1x32xf32>
    %c0_3 = arith.constant 0 : index
    %c0_4 = arith.constant 0 : index
    %2 = vector.load %arg3[%c0_3, %c0_4] : memref<1x32xf32, #tpu.memory_space<vmem>>, vector<1x32xf32>
    %cst = arith.constant dense<0.000000e+00> : vector<16xf32>
    %3 = vector.multi_reduction <add>, %0, %cst [1] : vector<16x32xf32> to vector<16xf32>
    %4 = vector.shape_cast %3 : vector<16xf32> to vector<16x1xf32>
    %cst_5 = arith.constant 3.200000e+01 : f32
    %5 = vector.broadcast %cst_5 : f32 to vector<16x1xf32>
    %6 = arith.divf %4, %5 : vector<16x1xf32>
    %7 = vector.broadcast %6 : vector<16x1xf32> to vector<16x32xf32>
    %8 = arith.subf %0, %7 : vector<16x32xf32>
    %9 = arith.mulf %8, %8 : vector<16x32xf32>
    %cst_6 = arith.constant dense<0.000000e+00> : vector<16xf32>
    %10 = vector.multi_reduction <add>, %9, %cst_6 [1] : vector<16x32xf32> to vector<16xf32>
    %11 = vector.shape_cast %10 : vector<16xf32> to vector<16x1xf32>
    %cst_7 = arith.constant 3.200000e+01 : f32
    %12 = vector.broadcast %cst_7 : f32 to vector<16x1xf32>
    %13 = arith.divf %11, %12 : vector<16x1xf32>
    %14 = vector.broadcast %6 : vector<16x1xf32> to vector<16x32xf32>
    %15 = arith.subf %0, %14 : vector<16x32xf32>
    %cst_8 = arith.constant 9.99999974E-6 : f32
    %16 = vector.broadcast %cst_8 : f32 to vector<16x1xf32>
    %17 = arith.addf %13, %16 : vector<16x1xf32>
    %18 = math.rsqrt %17 : vector<16x1xf32>
    %19 = vector.broadcast %18 : vector<16x1xf32> to vector<16x32xf32>
    %20 = arith.mulf %15, %19 : vector<16x32xf32>
    %21 = vector.broadcast %1 : vector<1x32xf32> to vector<16x32xf32>
    %22 = arith.mulf %20, %21 : vector<16x32xf32>
    %23 = vector.broadcast %2 : vector<1x32xf32> to vector<16x32xf32>
    %24 = arith.addf %22, %23 : vector<16x32xf32>
    %c0_9 = arith.constant 0 : index
    %c0_10 = arith.constant 0 : index
    %25 = vector.load %arg4[%c0_9, %c0_10] : memref<32x96xf32, #tpu.memory_space<vmem>>, vector<32x96xf32>
    %cst_11 = arith.constant dense<0.000000e+00> : vector<16x96xf32>
    %26 = tpu.matmul %24, %25, %cst_11 {dimension_numbers = #tpu.dot_dimension_numbers<[1], [0], [0], [1], [0, 0, 1, 1], [], []>} : vector<16x32xf32>, vector<32x96xf32>, vector<16x96xf32> -> vector<16x96xf32>
    %c0_12 = arith.constant 0 : index
    %c0_13 = arith.constant 0 : index
    %27 = vector.load %arg5[%c0_12, %c0_13] : memref<1x96xf32, #tpu.memory_space<vmem>>, vector<1x96xf32>
    %28 = vector.broadcast %27 : vector<1x96xf32> to vector<16x96xf32>
    %29 = arith.addf %26, %28 : vector<16x96xf32>
    %c0_14 = arith.constant 0 : index
    %c0_15 = arith.constant 0 : index
    %30 = vector.load %arg1[%c0_14, %c0_15] : memref<16x16xf32, #tpu.memory_space<vmem>>, vector<16x16xf32>
    %31 = vector.extract_strided_slice %29 {offsets = [0, 0], sizes = [16, 8], strides = [1, 1]} : vector<16x96xf32> to vector<16x8xf32>
    %32 = vector.extract_strided_slice %29 {offsets = [0, 32], sizes = [16, 8], strides = [1, 1]} : vector<16x96xf32> to vector<16x8xf32>
    %33 = vector.extract_strided_slice %29 {offsets = [0, 64], sizes = [16, 8], strides = [1, 1]} : vector<16x96xf32> to vector<16x8xf32>
    %cst_16 = arith.constant dense<0.000000e+00> : vector<16x16xf32>
    %34 = tpu.matmul %31, %32, %cst_16 {dimension_numbers = #tpu.dot_dimension_numbers<[1], [1], [0], [0], [0, 0, 1, 0], [], []>} : vector<16x8xf32>, vector<16x8xf32>, vector<16x16xf32> -> vector<16x16xf32>
    %35 = arith.addf %34, %30 : vector<16x16xf32>
    %cst_17 = arith.constant dense<0xFF800000> : vector<16xf32>
    %36 = vector.multi_reduction <maximumf>, %35, %cst_17 [1] : vector<16x16xf32> to vector<16xf32>
    %37 = vector.shape_cast %36 : vector<16xf32> to vector<16x1xf32>
    %38 = vector.broadcast %37 : vector<16x1xf32> to vector<16x16xf32>
    %39 = arith.subf %35, %38 : vector<16x16xf32>
    %40 = math.exp %39 : vector<16x16xf32>
    %cst_18 = arith.constant dense<0.000000e+00> : vector<16xf32>
    %41 = vector.multi_reduction <add>, %40, %cst_18 [1] : vector<16x16xf32> to vector<16xf32>
    %42 = vector.shape_cast %41 : vector<16xf32> to vector<16x1xf32>
    %43 = tpu.reciprocal %42 {approx = true} : vector<16x1xf32> -> vector<16x1xf32>
    %44 = vector.broadcast %43 : vector<16x1xf32> to vector<16x16xf32>
    %45 = arith.mulf %40, %44 : vector<16x16xf32>
    %cst_19 = arith.constant dense<0.000000e+00> : vector<16x8xf32>
    %46 = tpu.matmul %45, %33, %cst_19 {dimension_numbers = #tpu.dot_dimension_numbers<[1], [0], [0], [1], [0, 0, 1, 1], [], []>} : vector<16x16xf32>, vector<16x8xf32>, vector<16x8xf32> -> vector<16x8xf32>
    %47 = vector.extract_strided_slice %29 {offsets = [0, 8], sizes = [16, 8], strides = [1, 1]} : vector<16x96xf32> to vector<16x8xf32>
    %48 = vector.extract_strided_slice %29 {offsets = [0, 40], sizes = [16, 8], strides = [1, 1]} : vector<16x96xf32> to vector<16x8xf32>
    %49 = vector.extract_strided_slice %29 {offsets = [0, 72], sizes = [16, 8], strides = [1, 1]} : vector<16x96xf32> to vector<16x8xf32>
    %cst_20 = arith.constant dense<0.000000e+00> : vector<16x16xf32>
    %50 = tpu.matmul %47, %48, %cst_20 {dimension_numbers = #tpu.dot_dimension_numbers<[1], [1], [0], [0], [0, 0, 1, 0], [], []>} : vector<16x8xf32>, vector<16x8xf32>, vector<16x16xf32> -> vector<16x16xf32>
    %51 = arith.addf %50, %30 : vector<16x16xf32>
    %cst_21 = arith.constant dense<0xFF800000> : vector<16xf32>
    %52 = vector.multi_reduction <maximumf>, %51, %cst_21 [1] : vector<16x16xf32> to vector<16xf32>
    %53 = vector.shape_cast %52 : vector<16xf32> to vector<16x1xf32>
    %54 = vector.broadcast %53 : vector<16x1xf32> to vector<16x16xf32>
    %55 = arith.subf %51, %54 : vector<16x16xf32>
    %56 = math.exp %55 : vector<16x16xf32>
    %cst_22 = arith.constant dense<0.000000e+00> : vector<16xf32>
    %57 = vector.multi_reduction <add>, %56, %cst_22 [1] : vector<16x16xf32> to vector<16xf32>
    %58 = vector.shape_cast %57 : vector<16xf32> to vector<16x1xf32>
    %59 = tpu.reciprocal %58 {approx = true} : vector<16x1xf32> -> vector<16x1xf32>
    %60 = vector.broadcast %59 : vector<16x1xf32> to vector<16x16xf32>
    %61 = arith.mulf %56, %60 : vector<16x16xf32>
    %cst_23 = arith.constant dense<0.000000e+00> : vector<16x8xf32>
    %62 = tpu.matmul %61, %49, %cst_23 {dimension_numbers = #tpu.dot_dimension_numbers<[1], [0], [0], [1], [0, 0, 1, 1], [], []>} : vector<16x16xf32>, vector<16x8xf32>, vector<16x8xf32> -> vector<16x8xf32>
    %63 = vector.extract_strided_slice %29 {offsets = [0, 16], sizes = [16, 8], strides = [1, 1]} : vector<16x96xf32> to vector<16x8xf32>
    %64 = vector.extract_strided_slice %29 {offsets = [0, 48], sizes = [16, 8], strides = [1, 1]} : vector<16x96xf32> to vector<16x8xf32>
    %65 = vector.extract_strided_slice %29 {offsets = [0, 80], sizes = [16, 8], strides = [1, 1]} : vector<16x96xf32> to vector<16x8xf32>
    %cst_24 = arith.constant dense<0.000000e+00> : vector<16x16xf32>
    %66 = tpu.matmul %63, %64, %cst_24 {dimension_numbers = #tpu.dot_dimension_numbers<[1], [1], [0], [0], [0, 0, 1, 0], [], []>} : vector<16x8xf32>, vector<16x8xf32>, vector<16x16xf32> -> vector<16x16xf32>
    %67 = arith.addf %66, %30 : vector<16x16xf32>
    %cst_25 = arith.constant dense<0xFF800000> : vector<16xf32>
    %68 = vector.multi_reduction <maximumf>, %67, %cst_25 [1] : vector<16x16xf32> to vector<16xf32>
    %69 = vector.shape_cast %68 : vector<16xf32> to vector<16x1xf32>
    %70 = vector.broadcast %69 : vector<16x1xf32> to vector<16x16xf32>
    %71 = arith.subf %67, %70 : vector<16x16xf32>
    %72 = math.exp %71 : vector<16x16xf32>
    %cst_26 = arith.constant dense<0.000000e+00> : vector<16xf32>
    %73 = vector.multi_reduction <add>, %72, %cst_26 [1] : vector<16x16xf32> to vector<16xf32>
    %74 = vector.shape_cast %73 : vector<16xf32> to vector<16x1xf32>
    %75 = tpu.reciprocal %74 {approx = true} : vector<16x1xf32> -> vector<16x1xf32>
    %76 = vector.broadcast %75 : vector<16x1xf32> to vector<16x16xf32>
    %77 = arith.mulf %72, %76 : vector<16x16xf32>
    %cst_27 = arith.constant dense<0.000000e+00> : vector<16x8xf32>
    %78 = tpu.matmul %77, %65, %cst_27 {dimension_numbers = #tpu.dot_dimension_numbers<[1], [0], [0], [1], [0, 0, 1, 1], [], []>} : vector<16x16xf32>, vector<16x8xf32>, vector<16x8xf32> -> vector<16x8xf32>
    %79 = vector.extract_strided_slice %29 {offsets = [0, 24], sizes = [16, 8], strides = [1, 1]} : vector<16x96xf32> to vector<16x8xf32>
    %80 = vector.extract_strided_slice %29 {offsets = [0, 56], sizes = [16, 8], strides = [1, 1]} : vector<16x96xf32> to vector<16x8xf32>
    %81 = vector.extract_strided_slice %29 {offsets = [0, 88], sizes = [16, 8], strides = [1, 1]} : vector<16x96xf32> to vector<16x8xf32>
    %cst_28 = arith.constant dense<0.000000e+00> : vector<16x16xf32>
    %82 = tpu.matmul %79, %80, %cst_28 {dimension_numbers = #tpu.dot_dimension_numbers<[1], [1], [0], [0], [0, 0, 1, 0], [], []>} : vector<16x8xf32>, vector<16x8xf32>, vector<16x16xf32> -> vector<16x16xf32>
    %83 = arith.addf %82, %30 : vector<16x16xf32>
    %cst_29 = arith.constant dense<0xFF800000> : vector<16xf32>
    %84 = vector.multi_reduction <maximumf>, %83, %cst_29 [1] : vector<16x16xf32> to vector<16xf32>
    %85 = vector.shape_cast %84 : vector<16xf32> to vector<16x1xf32>
    %86 = vector.broadcast %85 : vector<16x1xf32> to vector<16x16xf32>
    %87 = arith.subf %83, %86 : vector<16x16xf32>
    %88 = math.exp %87 : vector<16x16xf32>
    %cst_30 = arith.constant dense<0.000000e+00> : vector<16xf32>
    %89 = vector.multi_reduction <add>, %88, %cst_30 [1] : vector<16x16xf32> to vector<16xf32>
    %90 = vector.shape_cast %89 : vector<16xf32> to vector<16x1xf32>
    %91 = tpu.reciprocal %90 {approx = true} : vector<16x1xf32> -> vector<16x1xf32>
    %92 = vector.broadcast %91 : vector<16x1xf32> to vector<16x16xf32>
    %93 = arith.mulf %88, %92 : vector<16x16xf32>
    %cst_31 = arith.constant dense<0.000000e+00> : vector<16x8xf32>
    %94 = tpu.matmul %93, %81, %cst_31 {dimension_numbers = #tpu.dot_dimension_numbers<[1], [0], [0], [1], [0, 0, 1, 1], [], []>} : vector<16x16xf32>, vector<16x8xf32>, vector<16x8xf32> -> vector<16x8xf32>
    %95 = tpu.concatenate %46, %62, %78, %94 in 1 : vector<16x8xf32>, vector<16x8xf32>, vector<16x8xf32>, vector<16x8xf32> -> vector<16x32xf32>
    %c0_32 = arith.constant 0 : index
    %c0_33 = arith.constant 0 : index
    %96 = vector.load %arg6[%c0_32, %c0_33] : memref<32x32xf32, #tpu.memory_space<vmem>>, vector<32x32xf32>
    %cst_34 = arith.constant dense<0.000000e+00> : vector<16x32xf32>
    %97 = tpu.matmul %95, %96, %cst_34 {dimension_numbers = #tpu.dot_dimension_numbers<[1], [0], [0], [1], [0, 0, 1, 1], [], []>} : vector<16x32xf32>, vector<32x32xf32>, vector<16x32xf32> -> vector<16x32xf32>
    %98 = arith.addf %0, %97 : vector<16x32xf32>
    %c0_35 = arith.constant 0 : index
    %c0_36 = arith.constant 0 : index
    %99 = vector.load %arg7[%c0_35, %c0_36] : memref<1x32xf32, #tpu.memory_space<vmem>>, vector<1x32xf32>
    %100 = vector.broadcast %99 : vector<1x32xf32> to vector<16x32xf32>
    %101 = arith.addf %98, %100 : vector<16x32xf32>
    %c0_37 = arith.constant 0 : index
    %c0_38 = arith.constant 0 : index
    %102 = vector.load %arg8[%c0_37, %c0_38] : memref<1x32xf32, #tpu.memory_space<vmem>>, vector<1x32xf32>
    %c0_39 = arith.constant 0 : index
    %c0_40 = arith.constant 0 : index
    %103 = vector.load %arg9[%c0_39, %c0_40] : memref<1x32xf32, #tpu.memory_space<vmem>>, vector<1x32xf32>
    %cst_41 = arith.constant dense<0.000000e+00> : vector<16xf32>
    %104 = vector.multi_reduction <add>, %101, %cst_41 [1] : vector<16x32xf32> to vector<16xf32>
    %105 = vector.shape_cast %104 : vector<16xf32> to vector<16x1xf32>
    %cst_42 = arith.constant 3.200000e+01 : f32
    %106 = vector.broadcast %cst_42 : f32 to vector<16x1xf32>
    %107 = arith.divf %105, %106 : vector<16x1xf32>
    %108 = vector.broadcast %107 : vector<16x1xf32> to vector<16x32xf32>
    %109 = arith.subf %101, %108 : vector<16x32xf32>
    %110 = arith.mulf %109, %109 : vector<16x32xf32>
    %cst_43 = arith.constant dense<0.000000e+00> : vector<16xf32>
    %111 = vector.multi_reduction <add>, %110, %cst_43 [1] : vector<16x32xf32> to vector<16xf32>
    %112 = vector.shape_cast %111 : vector<16xf32> to vector<16x1xf32>
    %cst_44 = arith.constant 3.200000e+01 : f32
    %113 = vector.broadcast %cst_44 : f32 to vector<16x1xf32>
    %114 = arith.divf %112, %113 : vector<16x1xf32>
    %115 = vector.broadcast %107 : vector<16x1xf32> to vector<16x32xf32>
    %116 = arith.subf %101, %115 : vector<16x32xf32>
    %cst_45 = arith.constant 9.99999974E-6 : f32
    %117 = vector.broadcast %cst_45 : f32 to vector<16x1xf32>
    %118 = arith.addf %114, %117 : vector<16x1xf32>
    %119 = math.rsqrt %118 : vector<16x1xf32>
    %120 = vector.broadcast %119 : vector<16x1xf32> to vector<16x32xf32>
    %121 = arith.mulf %116, %120 : vector<16x32xf32>
    %122 = vector.broadcast %102 : vector<1x32xf32> to vector<16x32xf32>
    %123 = arith.mulf %121, %122 : vector<16x32xf32>
    %124 = vector.broadcast %103 : vector<1x32xf32> to vector<16x32xf32>
    %125 = arith.addf %123, %124 : vector<16x32xf32>
    %c0_46 = arith.constant 0 : index
    %c0_47 = arith.constant 0 : index
    %126 = vector.load %arg10[%c0_46, %c0_47] : memref<32x128xf32, #tpu.memory_space<vmem>>, vector<32x128xf32>
    %cst_48 = arith.constant dense<0.000000e+00> : vector<16x128xf32>
    %127 = tpu.matmul %125, %126, %cst_48 {dimension_numbers = #tpu.dot_dimension_numbers<[1], [0], [0], [1], [0, 0, 1, 1], [], []>} : vector<16x32xf32>, vector<32x128xf32>, vector<16x128xf32> -> vector<16x128xf32>
    %c0_49 = arith.constant 0 : index
    %c0_50 = arith.constant 0 : index
    %128 = vector.load %arg11[%c0_49, %c0_50] : memref<1x128xf32, #tpu.memory_space<vmem>>, vector<1x128xf32>
    %129 = vector.broadcast %128 : vector<1x128xf32> to vector<16x128xf32>
    %130 = arith.addf %127, %129 : vector<16x128xf32>
    %cst_51 = arith.constant 5.000000e-01 : f32
    %131 = vector.broadcast %cst_51 : f32 to vector<16x128xf32>
    %132 = arith.mulf %131, %130 : vector<16x128xf32>
    %cst_52 = arith.constant 4.471500e-02 : f32
    %133 = vector.broadcast %cst_52 : f32 to vector<16x128xf32>
    %134 = arith.mulf %133, %130 : vector<16x128xf32>
    %135 = arith.mulf %134, %130 : vector<16x128xf32>
    %136 = arith.mulf %135, %130 : vector<16x128xf32>
    %137 = arith.addf %130, %136 : vector<16x128xf32>
    %cst_53 = arith.constant 0.797884583 : f32
    %138 = vector.broadcast %cst_53 : f32 to vector<16x128xf32>
    %139 = arith.mulf %138, %137 : vector<16x128xf32>
    %140 = math.tanh %139 : vector<16x128xf32>
    %cst_54 = arith.constant 1.000000e+00 : f32
    %141 = vector.broadcast %cst_54 : f32 to vector<16x128xf32>
    %142 = arith.addf %141, %140 : vector<16x128xf32>
    %143 = arith.mulf %132, %142 : vector<16x128xf32>
    %c0_55 = arith.constant 0 : index
    %c0_56 = arith.constant 0 : index
    %144 = vector.load %arg12[%c0_55, %c0_56] : memref<128x32xf32, #tpu.memory_space<vmem>>, vector<128x32xf32>
    %cst_57 = arith.constant dense<0.000000e+00> : vector<16x32xf32>
    %145 = tpu.matmul %143, %144, %cst_57 {dimension_numbers = #tpu.dot_dimension_numbers<[1], [0], [0], [1], [0, 0, 1, 1], [], []>} : vector<16x128xf32>, vector<128x32xf32>, vector<16x32xf32> -> vector<16x32xf32>
    %c0_58 = arith.constant 0 : index
    %c0_59 = arith.constant 0 : index
    %146 = vector.load %arg13[%c0_58, %c0_59] : memref<1x32xf32, #tpu.memory_space<vmem>>, vector<1x32xf32>
    %147 = vector.broadcast %146 : vector<1x32xf32> to vector<16x32xf32>
    %148 = arith.addf %145, %147 : vector<16x32xf32>
    %149 = arith.addf %101, %148 : vector<16x32xf32>
    %c0_60 = arith.constant 0 : index
    %c0_61 = arith.constant 0 : index
    %150 = vector.load %arg14[%c0_60, %c0_61] : memref<16x32xf32, #tpu.memory_space<vmem>>, vector<16x32xf32>
    tpu.vector_store %arg14[%c0_60, %c0_61], %149 {strides = array<i32>} : memref<16x32xf32, #tpu.memory_space<vmem>>, vector<16x32xf32>,
    return
  }
}

</mosaic_0001>

<llo_original>
// kernel: gpt_block.1
$region0: #{gpt_block.1}
  #allocation0 [shape = 'u32[]', space=smem, size = 0x4, offset = 0x4, fixed_abs, tag = 'smem constant byte address 0x4 - core index']
  #allocation1 [shape = 'u32[144,128]{1,0:T(1,128)}', space=vmem, size = 0x12000, scoped, tag = 'internal scratch']
  %s0 = inlined_call_operand.vmem [shape: f32[16,32], index: 0, kind: input, shape index: {}]
  %s1 = inlined_call_operand.vmem [shape: f32[16,16], index: 1, kind: input, shape index: {}]
  %s2 = inlined_call_operand.vmem [shape: f32[1,32], index: 2, kind: input, shape index: {}]
  %s3 = inlined_call_operand.vmem [shape: f32[1,32], index: 3, kind: input, shape index: {}]
  %s4 = inlined_call_operand.vmem [shape: f32[32,96], index: 4, kind: input, shape index: {}]
  %s5 = inlined_call_operand.vmem [shape: f32[1,96], index: 5, kind: input, shape index: {}]
  %s6 = inlined_call_operand.vmem [shape: f32[32,32], index: 6, kind: input, shape index: {}]
  %s7 = inlined_call_operand.vmem [shape: f32[1,32], index: 7, kind: input, shape index: {}]
  %s8 = inlined_call_operand.vmem [shape: f32[1,32], index: 8, kind: input, shape index: {}]
  %s9 = inlined_call_operand.vmem [shape: f32[1,32], index: 9, kind: input, shape index: {}]
  %s10 = inlined_call_operand.vmem [shape: f32[32,128], index: 10, kind: input, shape index: {}]
  %s11 = inlined_call_operand.vmem [shape: f32[1,128], index: 11, kind: input, shape index: {}]
  %s12 = inlined_call_operand.vmem [shape: f32[128,32], index: 12, kind: input, shape index: {}]
  %s13 = inlined_call_operand.vmem [shape: f32[1,32], index: 13, kind: input, shape index: {}]
  %s14 = inlined_call_operand.hbm [shape: f32[16,32], index: 14, kind: output, shape index: {}]
  %s15 = sld [smem:[#allocation0]]
  $region66: #{gpt_block.1} parent=0
    _
  %s17 = ssub.s32 1, %s15
  %s18 = scalar_select 0, %s17, %s15
  $region1: #{gpt_block.1} parent=0
    #allocation2 [shape = 'u8[8192]{0}', space=vmem, size = 0x2000, scoped, tag = 'output window, operand 0, single buffered']
    #allocation3 [shape = 's32[1]{0}', space=sflag, size = 0x4, scoped, tag = 'scoped memory for gpt_block.1']
    %19 = vsyncpa [#allocation3], 0
    // Predicated region
    $region2: #{gpt_block.1} parent=1 // pred_check
      _
    $region3: #{gpt_block.1} parent=1 // pred_check_branch
      %21 = sbr.rel (0) target = $region5
    $region4: #{gpt_block.1} parent=1 // pred_region
      _
    $region5: #{gpt_block.1} parent=1 // pred_fallthru
      _
    // Predicated region
    $region6: #{gpt_block.1} parent=1 // pred_check
      _
    $region7: #{gpt_block.1} parent=1 // pred_check_branch
      %23 = sbr.rel (0) target = $region9
    $region8: #{gpt_block.1} parent=1 // pred_region
      _
    $region9: #{gpt_block.1} parent=1 // pred_fallthru
      _
    // Predicated region
    $region10: #{gpt_block.1} parent=1 // pred_check
      _
    $region11: #{gpt_block.1} parent=1 // pred_check_branch
      %25 = sbr.rel (0) target = $region13
    $region12: #{gpt_block.1} parent=1 // pred_region
      _
    $region13: #{gpt_block.1} parent=1 // pred_fallthru
      _
    // Predicated region
    $region14: #{gpt_block.1} parent=1 // pred_check
      _
    $region15: #{gpt_block.1} parent=1 // pred_check_branch
      %27 = sbr.rel (0) target = $region17
    $region16: #{gpt_block.1} parent=1 // pred_region
      _
    $region17: #{gpt_block.1} parent=1 // pred_fallthru
      _
    // Predicated region
    $region18: #{gpt_block.1} parent=1 // pred_check
      _
    $region19: #{gpt_block.1} parent=1 // pred_check_branch
      %29 = sbr.rel (0) target = $region21
    $region20: #{gpt_block.1} parent=1 // pred_region
      _
    $region21: #{gpt_block.1} parent=1 // pred_fallthru
      _
    // Predicated region
    $region22: #{gpt_block.1} parent=1 // pred_check
      _
    $region23: #{gpt_block.1} parent=1 // pred_check_branch
      %31 = sbr.rel (0) target = $region25
    $region24: #{gpt_block.1} parent=1 // pred_region
      _
    $region25: #{gpt_block.1} parent=1 // pred_fallthru
      _
    // Predicated region
    $region26: #{gpt_block.1} parent=1 // pred_check
      _
    $region27: #{gpt_block.1} parent=1 // pred_check_branch
      %33 = sbr.rel (0) target = $region29
    $region28: #{gpt_block.1} parent=1 // pred_region
      _
    $region29: #{gpt_block.1} parent=1 // pred_fallthru
      _
    // Predicated region
    $region30: #{gpt_block.1} parent=1 // pred_check
      _
    $region31: #{gpt_block.1} parent=1 // pred_check_branch
      %35 = sbr.rel (0) target = $region33
    $region32: #{gpt_block.1} parent=1 // pred_region
      _
    $region33: #{gpt_block.1} parent=1 // pred_fallthru
      _
    // Predicated region
    $region34: #{gpt_block.1} parent=1 // pred_check
      _
    $region35: #{gpt_block.1} parent=1 // pred_check_branch
      %37 = sbr.rel (0) target = $region37
    $region36: #{gpt_block.1} parent=1 // pred_region
      _
    $region37: #{gpt_block.1} parent=1 // pred_fallthru
      _
    // Predicated region
    $region38: #{gpt_block.1} parent=1 // pred_check
      _
    $region39: #{gpt_block.1} parent=1 // pred_check_branch
      %39 = sbr.rel (0) target = $region41
    $region40: #{gpt_block.1} parent=1 // pred_region
      _
    $region41: #{gpt_block.1} parent=1 // pred_fallthru
      _
    // Predicated region
    $region42: #{gpt_block.1} parent=1 // pred_check
      _
    $region43: #{gpt_block.1} parent=1 // pred_check_branch
      %41 = sbr.rel (0) target = $region45
    $region44: #{gpt_block.1} parent=1 // pred_region
      _
    $region45: #{gpt_block.1} parent=1 // pred_fallthru
      _
    // Predicated region
    $region46: #{gpt_block.1} parent=1 // pred_check
      _
    $region47: #{gpt_block.1} parent=1 // pred_check_branch
      %43 = sbr.rel (0) target = $region49
    $region48: #{gpt_block.1} parent=1 // pred_region
      _
    $region49: #{gpt_block.1} parent=1 // pred_fallthru
      _
    // Predicated region
    $region50: #{gpt_block.1} parent=1 // pred_check
      _
    $region51: #{gpt_block.1} parent=1 // pred_check_branch
      %45 = sbr.rel (0) target = $region53
    $region52: #{gpt_block.1} parent=1 // pred_region
      _
    $region53: #{gpt_block.1} parent=1 // pred_fallthru
      _
    // Predicated region
    $region54: #{gpt_block.1} parent=1 // pred_check
      _
    $region55: #{gpt_block.1} parent=1 // pred_check_branch
      %47 = sbr.rel (0) target = $region57
    $region56: #{gpt_block.1} parent=1 // pred_region
      _
    $region57: #{gpt_block.1} parent=1 // pred_fallthru
      _
    %v48 = vld [vmem:[%s0] sm:$0xff]
    %v49 = vld [vmem:[%s0 + $0x8] sm:$0xff]
    %v50 = vld [vmem:[%s2] sm:$0x1]
    %v51 = vld [vmem:[%s3] sm:$0x1]
    %vm52 = vcmask 261120
    %v53 = vsel %vm52, %v48, 0.0
    %54 = vadd.xlane.f32.xlu0 %v53
    %v55 = vpop.xlane.xlu0 %54
    %v56 = vsel %vm52, %v49, 0.0
    %57 = vadd.xlane.f32.xlu0 %v56
    %v58 = vpop.xlane.xlu0 %57
    %v59 = vrcp.pop 32.0
    %v60 = vmul.f32 %v55, %v59
    %v61 = vmul.f32 %v58, %v59
    %v62 = vsub.f32 %v48, %v60
    %v63 = vsub.f32 %v49, %v61
    %v64 = vmul.f32 %v62, %v62
    %v65 = vmul.f32 %v63, %v63
    %v66 = vsel %vm52, %v64, 0.0
    %67 = vadd.xlane.f32.xlu0 %v66
    %v68 = vpop.xlane.xlu0 %67
    %v69 = vsel %vm52, %v65, 0.0
    %70 = vadd.xlane.f32.xlu0 %v69
    %v71 = vpop.xlane.xlu0 %70
    %v72 = vmul.f32 %v68, %v59
    %v73 = vmul.f32 %v71, %v59
    %v74 = vadd.f32 %v72, 1e-05
    %v75 = vadd.f32 %v73, 1e-05
    %v76 = vrsqrt.pop %v74
    %v77 = vrsqrt.pop %v75
    %v78 = vmul.f32 %v62, %v76
    %v79 = vmul.f32 %v63, %v77
    %v81 = vlaneseq
    %v82 = vshrl.u32 %v81, 7
    %v83 = vsub.s32 0, %v82
    %v84 = vrot.slane %v50, %v83
    %v86 = vmul.f32 %v78, %v84
    %v87 = vmul.f32 %v79, %v84
    %v89 = vlaneseq
    %v90 = vshrl.u32 %v89, 7
    %v91 = vsub.s32 0, %v90
    %v92 = vrot.slane %v51, %v91
    %v94 = vadd.f32 %v86, %v92
    %v95 = vadd.f32 %v87, %v92
    %v96 = vld [vmem:[%s4] sm:$0xff]
    %v97 = vld [vmem:[%s4 + $0x8] sm:$0xff]
    %v98 = vld [vmem:[%s4 + $0x10] sm:$0xff]
    %v99 = vld [vmem:[%s4 + $0x18] sm:$0xff]
    %v100 = vld [vmem:[%s5] sm:$0x1]
    %v102 = vlaneseq
    %v103 = vshrl.u32 %v102, 7
    %v104 = vsub.s32 0, %v103
    %v105 = vrot.slane %v100, %v104
    %v108 = vsel %vm52, %v94, 0
    %v111 = vsel %vm52, %v95, 0
    %113 = vmatprep.subr.mxu0 0.0
    %114 = vmatpush1.msra.mxu0 %v96
    %115 = vmatprep.subr.mxu0 0.0
    %116 = vmatpush1.msra.mxu0 %v97
    %117 = vmatprep.subr.mxu0 0.0
    %118 = vmatpush1.msra.mxu0 %v98
    %119 = vmatprep.subr.mxu0 0.0
    %120 = vmatpush1.msra.mxu0 %v99
    %121 = vmatprep.subr.mxu0 0.0
    %122 = vmatpush1.msra.mxu0 0.0
    %123 = vmatprep.subr.mxu0 0.0
    %124 = vmatpush1.msra.mxu0 0.0
    %125 = vmatprep.subr.mxu0 0.0
    %126 = vmatpush1.msra.mxu0 0.0
    %127 = vmatprep.subr.mxu0 0.0
    %128 = vmatpush1.msra.mxu0 0.0
    %129 = vmatprep.subr.mxu0 0.0
    %130 = vmatpush1.msra.mxu0 0.0
    %131 = vmatprep.subr.mxu0 0.0
    %132 = vmatpush1.msra.mxu0 0.0
    %133 = vmatprep.subr.mxu0 0.0
    %134 = vmatpush1.msra.mxu0 0.0
    %135 = vmatprep.subr.mxu0 0.0
    %136 = vmatpush1.msra.mxu0 0.0
    %137 = vmatprep.subr.mxu0 0.0
    %138 = vmatpush1.msra.mxu0 0.0
    %139 = vmatprep.subr.mxu0 0.0
    %140 = vmatpush1.msra.mxu0 0.0
    %141 = vmatprep.subr.mxu0 0.0
    %142 = vmatpush1.msra.mxu0 0.0
    %143 = vmatprep.subr.mxu0 0.0
    %144 = vmatpush1.msra.mxu0 0.0
    %145 = vmatprep.subr.mxu0 0.0
    %146 = vmatpush1.msra.mxu0 0.0
    %147 = vmatprep.subr.mxu0 0.0
    %148 = vmatpush1.msra.mxu0 0.0
    %149 = vmatprep.subr.mxu0 0.0
    %150 = vmatpush1.msra.mxu0 0.0
    %151 = vmatprep.subr.mxu0 0.0
    %152 = vmatpush1.msra.mxu0 0.0
    %153 = vmatprep.subr.mxu0 0.0
    %154 = vmatpush1.msra.mxu0 0.0
    %155 = vmatprep.subr.mxu0 0.0
    %156 = vmatpush1.msra.mxu0 0.0
    %157 = vmatprep.subr.mxu0 0.0
    %158 = vmatpush1.msra.mxu0 0.0
    %159 = vmatprep.subr.mxu0 0.0
    %160 = vmatpush1.msra.mxu0 0.0
    %161 = vmatprep.subr.mxu0 0.0
    %162 = vmatpush1.msra.mxu0 0.0
    %163 = vmatprep.subr.mxu0 0.0
    %164 = vmatpush1.msra.mxu0 0.0
    %165 = vmatprep.subr.mxu0 0.0
    %166 = vmatpush1.msra.mxu0 0.0
    %167 = vmatprep.subr.mxu0 0.0
    %168 = vmatpush1.msra.mxu0 0.0
    %169 = vmatprep.subr.mxu0 0.0
    %170 = vmatpush1.msra.mxu0 0.0
    %171 = vmatprep.subr.mxu0 0.0
    %172 = vmatpush1.msra.mxu0 0.0
    %173 = vmatprep.subr.mxu0 0.0
    %174 = vmatpush1.msra.mxu0 0.0
    %175 = vmatprep.subr.mxu0 0.0
    %176 = vmatpush1.msra.mxu0 0.0
    %177 = vmatprep.mubr.f32.mxu0 0.0
    %178 = vmatmul.mubr.f32.gmra.mrb[0].mxu0 %v108
    %v179 = vpop.f32.mrb[0].mxu0
    %v180 = vadd.f32 %v105, %v179
    %v181 = vpop.f32.mrb[0].mxu0
    %182 = vmatprep.mubr.f32.mxu0 0.0
    %183 = vmatmul.mubr.f32.gmra.mrb[0].mxu0 %v111
    %v184 = vpop.f32.mrb[0].mxu0
    %v185 = vadd.f32 %v105, %v184
    %v186 = vpop.f32.mrb[0].mxu0
    %187 = vdwg.mxu0
    %v188 = vld [vmem:[%s1] sm:$0xff]
    %v189 = vld [vmem:[%s1 + $0x8] sm:$0xff]
    %192 = vrot.lane.b32.xlu0 %v180, 96
    %v193 = vpop.permute.xlu0 %192
    %194 = vrot.lane.b32.xlu0 %v185, 96
    %v195 = vpop.permute.xlu0 %194
    %vm196 = vcmask 64512
    %v197 = vsel %vm196, %v180, 0
    %v199 = vsel %vm196, %v185, 0
    %v201 = vsel %vm196, %v193, 0
    %v203 = vsel %vm196, %v195, 0
    %205 = vmatprep.subr.mxu0 0.0
    %206 = vmatpush1.xpose.msra.mxu0 %v201
    %207 = vmatprep.subr.mxu0 0.0
    %208 = vmatpush1.xpose.msra.mxu0 %v203
    %209 = vmatprep.subr.mxu0 0.0
    %210 = vmatpush1.xpose.msra.mxu0 0.0
    %211 = vmatprep.subr.mxu0 0.0
    %212 = vmatpush1.xpose.msra.mxu0 0.0
    %213 = vmatprep.subr.mxu0 0.0
    %214 = vmatpush1.xpose.msra.mxu0 0.0
    %215 = vmatprep.subr.mxu0 0.0
    %216 = vmatpush1.xpose.msra.mxu0 0.0
    %217 = vmatprep.subr.mxu0 0.0
    %218 = vmatpush1.xpose.msra.mxu0 0.0
    %219 = vmatprep.subr.mxu0 0.0
    %220 = vmatpush1.xpose.msra.mxu0 0.0
    %221 = vmatprep.subr.mxu0 0.0
    %222 = vmatpush1.xpose.msra.mxu0 0.0
    %223 = vmatprep.subr.mxu0 0.0
    %224 = vmatpush1.xpose.msra.mxu0 0.0
    %225 = vmatprep.subr.mxu0 0.0
    %226 = vmatpush1.xpose.msra.mxu0 0.0
    %227 = vmatprep.subr.mxu0 0.0
    %228 = vmatpush1.xpose.msra.mxu0 0.0
    %229 = vmatprep.subr.mxu0 0.0
    %230 = vmatpush1.xpose.msra.mxu0 0.0
    %231 = vmatprep.subr.mxu0 0.0
    %232 = vmatpush1.xpose.msra.mxu0 0.0
    %233 = vmatprep.subr.mxu0 0.0
    %234 = vmatpush1.xpose.msra.mxu0 0.0
    %235 = vmatprep.subr.mxu0 0.0
    %236 = vmatpush1.xpose.msra.mxu0 0.0
    %237 = vmatprep.subr.mxu0 0.0
    %238 = vmatpush1.xpose.msra.mxu0 0.0
    %239 = vmatprep.subr.mxu0 0.0
    %240 = vmatpush1.xpose.msra.mxu0 0.0
    %241 = vmatprep.subr.mxu0 0.0
    %242 = vmatpush1.xpose.msra.mxu0 0.0
    %243 = vmatprep.subr.mxu0 0.0
    %244 = vmatpush1.xpose.msra.mxu0 0.0
    %245 = vmatprep.subr.mxu0 0.0
    %246 = vmatpush1.xpose.msra.mxu0 0.0
    %247 = vmatprep.subr.mxu0 0.0
    %248 = vmatpush1.xpose.msra.mxu0 0.0
    %249 = vmatprep.subr.mxu0 0.0
    %250 = vmatpush1.xpose.msra.mxu0 0.0
    %251 = vmatprep.subr.mxu0 0.0
    %252 = vmatpush1.xpose.msra.mxu0 0.0
    %253 = vmatprep.subr.mxu0 0.0
    %254 = vmatpush1.xpose.msra.mxu0 0.0
    %255 = vmatprep.subr.mxu0 0.0
    %256 = vmatpush1.xpose.msra.mxu0 0.0
    %257 = vmatprep.subr.mxu0 0.0
    %258 = vmatpush1.xpose.msra.mxu0 0.0
    %259 = vmatprep.subr.mxu0 0.0
    %260 = vmatpush1.xpose.msra.mxu0 0.0
    %261 = vmatprep.subr.mxu0 0.0
    %262 = vmatpush1.xpose.msra.mxu0 0.0
    %263 = vmatprep.subr.mxu0 0.0
    %264 = vmatpush1.xpose.msra.mxu0 0.0
    %265 = vmatprep.subr.mxu0 0.0
    %266 = vmatpush1.xpose.msra.mxu0 0.0
    %267 = vmatprep.subr.mxu0 0.0
    %268 = vmatpush1.xpose.msra.mxu0 0.0
    %269 = vmatprep.mubr.f32.mxu0 0.0
    %270 = vmatmul.mubr.f32.gmra.mrb[0].mxu0 %v197
    %v271 = vpop.f32.mrb[0].mxu0
    %v272 = vadd.f32 %v188, %v271
    %v273 = vpop.f32.mrb[0].mxu0
    %274 = vmatprep.mubr.f32.mxu0 0.0
    %275 = vmatmul.mubr.f32.gmra.mrb[0].mxu0 %v199
    %v276 = vpop.f32.mrb[0].mxu0
    %v277 = vadd.f32 %v189, %v276
    %v278 = vpop.f32.mrb[0].mxu0
    %279 = vdwg.mxu0
    %vm280 = vcmask 130048
    %v281 = vsel %vm280, %v272, -inf
    %282 = vmax.xlane.f32.xlu0 %v281
    %v283 = vpop.xlane.xlu0 %282
    %v284 = vsel %vm280, %v277, -inf
    %285 = vmax.xlane.f32.xlu0 %v284
    %v286 = vpop.xlane.xlu0 %285
    %v287 = vsub.f32 %v272, %v283
    %v288 = vsub.f32 %v277, %v286
    %v289 = vmul.f32 %v287, 1.442695
    %v290 = vpow.pop %v289
    %v291 = vmul.f32 %v288, 1.442695
    %v292 = vpow.pop %v291
    %v293 = vsel %vm280, %v290, 0.0
    %294 = vadd.xlane.f32.xlu0 %v293
    %v295 = vpop.xlane.xlu0 %294
    %v296 = vsel %vm280, %v292, 0.0
    %297 = vadd.xlane.f32.xlu0 %v296
    %v298 = vpop.xlane.xlu0 %297
    %v299 = vrcp.pop %v295
    %v300 = vrcp.pop %v298
    %v301 = vmul.f32 %v290, %v299
    %v302 = vmul.f32 %v292, %v300
    %303 = vrot.lane.b32.xlu0 %v180, 64
    %v304 = vpop.permute.xlu0 %303
    %305 = vrot.lane.b32.xlu0 %v185, 64
    %v306 = vpop.permute.xlu0 %305
    %v310 = vsel %vm280, %v301, 0
    %v313 = vsel %vm280, %v302, 0
    %315 = vmatprep.subr.mxu0 0.0
    %316 = vmatpush1.msra.mxu0 %v304
    %317 = vmatprep.subr.mxu0 0.0
    %318 = vmatpush1.msra.mxu0 %v306
    %319 = vmatprep.subr.mxu0 0.0
    %320 = vmatpush1.msra.mxu0 0.0
    %321 = vmatprep.subr.mxu0 0.0
    %322 = vmatpush1.msra.mxu0 0.0
    %323 = vmatprep.subr.mxu0 0.0
    %324 = vmatpush1.msra.mxu0 0.0
    %325 = vmatprep.subr.mxu0 0.0
    %326 = vmatpush1.msra.mxu0 0.0
    %327 = vmatprep.subr.mxu0 0.0
    %328 = vmatpush1.msra.mxu0 0.0
    %329 = vmatprep.subr.mxu0 0.0
    %330 = vmatpush1.msra.mxu0 0.0
    %331 = vmatprep.subr.mxu0 0.0
    %332 = vmatpush1.msra.mxu0 0.0
    %333 = vmatprep.subr.mxu0 0.0
    %334 = vmatpush1.msra.mxu0 0.0
    %335 = vmatprep.subr.mxu0 0.0
    %336 = vmatpush1.msra.mxu0 0.0
    %337 = vmatprep.subr.mxu0 0.0
    %338 = vmatpush1.msra.mxu0 0.0
    %339 = vmatprep.subr.mxu0 0.0
    %340 = vmatpush1.msra.mxu0 0.0
    %341 = vmatprep.subr.mxu0 0.0
    %342 = vmatpush1.msra.mxu0 0.0
    %343 = vmatprep.subr.mxu0 0.0
    %344 = vmatpush1.msra.mxu0 0.0
    %345 = vmatprep.subr.mxu0 0.0
    %346 = vmatpush1.msra.mxu0 0.0
    %347 = vmatprep.subr.mxu0 0.0
    %348 = vmatpush1.msra.mxu0 0.0
    %349 = vmatprep.subr.mxu0 0.0
    %350 = vmatpush1.msra.mxu0 0.0
    %351 = vmatprep.subr.mxu0 0.0
    %352 = vmatpush1.msra.mxu0 0.0
    %353 = vmatprep.subr.mxu0 0.0
    %354 = vmatpush1.msra.mxu0 0.0
    %355 = vmatprep.subr.mxu0 0.0
    %356 = vmatpush1.msra.mxu0 0.0
    %357 = vmatprep.subr.mxu0 0.0
    %358 = vmatpush1.msra.mxu0 0.0
    %359 = vmatprep.subr.mxu0 0.0
    %360 = vmatpush1.msra.mxu0 0.0
    %361 = vmatprep.subr.mxu0 0.0
    %362 = vmatpush1.msra.mxu0 0.0
    %363 = vmatprep.subr.mxu0 0.0
    %364 = vmatpush1.msra.mxu0 0.0
    %365 = vmatprep.subr.mxu0 0.0
    %366 = vmatpush1.msra.mxu0 0.0
    %367 = vmatprep.subr.mxu0 0.0
    %368 = vmatpush1.msra.mxu0 0.0
    %369 = vmatprep.subr.mxu0 0.0
    %370 = vmatpush1.msra.mxu0 0.0
    %371 = vmatprep.subr.mxu0 0.0
    %372 = vmatpush1.msra.mxu0 0.0
    %373 = vmatprep.subr.mxu0 0.0
    %374 = vmatpush1.msra.mxu0 0.0
    %375 = vmatprep.subr.mxu0 0.0
    %376 = vmatpush1.msra.mxu0 0.0
    %377 = vmatprep.subr.mxu0 0.0
    %378 = vmatpush1.msra.mxu0 0.0
    %379 = vmatprep.mubr.f32.mxu0 0.0
    %380 = vmatmul.mubr.f32.gmra.mrb[0].mxu0 %v310
    %v381 = vpop.f32.mrb[0].mxu0
    %v382 = vadd.f32 0.0, %v381
    %v383 = vpop.f32.mrb[0].mxu0
    %384 = vmatprep.mubr.f32.mxu0 0.0
    %385 = vmatmul.mubr.f32.gmra.mrb[0].mxu0 %v313
    %v386 = vpop.f32.mrb[0].mxu0
    %v387 = vadd.f32 0.0, %v386
    %v388 = vpop.f32.mrb[0].mxu0
    %389 = vdwg.mxu0
    %390 = vrot.lane.b32.xlu0 %v180, 120
    %v391 = vpop.permute.xlu0 %390
    %392 = vrot.lane.b32.xlu0 %v185, 120
    %v393 = vpop.permute.xlu0 %392
    %394 = vrot.lane.b32.xlu0 %v180, 88
    %v395 = vpop.permute.xlu0 %394
    %396 = vrot.lane.b32.xlu0 %v185, 88
    %v397 = vpop.permute.xlu0 %396
    %v398 = vsel %vm196, %v391, 0
    %v400 = vsel %vm196, %v393, 0
    %v402 = vsel %vm196, %v395, 0
    %v404 = vsel %vm196, %v397, 0
    %406 = vmatprep.subr.mxu0 0.0
    %407 = vmatpush1.xpose.msra.mxu0 %v402
    %408 = vmatprep.subr.mxu0 0.0
    %409 = vmatpush1.xpose.msra.mxu0 %v404
    %410 = vmatprep.subr.mxu0 0.0
    %411 = vmatpush1.xpose.msra.mxu0 0.0
    %412 = vmatprep.subr.mxu0 0.0
    %413 = vmatpush1.xpose.msra.mxu0 0.0
    %414 = vmatprep.subr.mxu0 0.0
    %415 = vmatpush1.xpose.msra.mxu0 0.0
    %416 = vmatprep.subr.mxu0 0.0
    %417 = vmatpush1.xpose.msra.mxu0 0.0
    %418 = vmatprep.subr.mxu0 0.0
    %419 = vmatpush1.xpose.msra.mxu0 0.0
    %420 = vmatprep.subr.mxu0 0.0
    %421 = vmatpush1.xpose.msra.mxu0 0.0
    %422 = vmatprep.subr.mxu0 0.0
    %423 = vmatpush1.xpose.msra.mxu0 0.0
    %424 = vmatprep.subr.mxu0 0.0
    %425 = vmatpush1.xpose.msra.mxu0 0.0
    %426 = vmatprep.subr.mxu0 0.0
    %427 = vmatpush1.xpose.msra.mxu0 0.0
    %428 = vmatprep.subr.mxu0 0.0
    %429 = vmatpush1.xpose.msra.mxu0 0.0
    %430 = vmatprep.subr.mxu0 0.0
    %431 = vmatpush1.xpose.msra.mxu0 0.0
    %432 = vmatprep.subr.mxu0 0.0
    %433 = vmatpush1.xpose.msra.mxu0 0.0
    %434 = vmatprep.subr.mxu0 0.0
    %435 = vmatpush1.xpose.msra.mxu0 0.0
    %436 = vmatprep.subr.mxu0 0.0
    %437 = vmatpush1.xpose.msra.mxu0 0.0
    %438 = vmatprep.subr.mxu0 0.0
    %439 = vmatpush1.xpose.msra.mxu0 0.0
    %440 = vmatprep.subr.mxu0 0.0
    %441 = vmatpush1.xpose.msra.mxu0 0.0
    %442 = vmatprep.subr.mxu0 0.0
    %443 = vmatpush1.xpose.msra.mxu0 0.0
    %444 = vmatprep.subr.mxu0 0.0
    %445 = vmatpush1.xpose.msra.mxu0 0.0
    %446 = vmatprep.subr.mxu0 0.0
    %447 = vmatpush1.xpose.msra.mxu0 0.0
    %448 = vmatprep.subr.mxu0 0.0
    %449 = vmatpush1.xpose.msra.mxu0 0.0
    %450 = vmatprep.subr.mxu0 0.0
    %451 = vmatpush1.xpose.msra.mxu0 0.0
    %452 = vmatprep.subr.mxu0 0.0
    %453 = vmatpush1.xpose.msra.mxu0 0.0
    %454 = vmatprep.subr.mxu0 0.0
    %455 = vmatpush1.xpose.msra.mxu0 0.0
    %456 = vmatprep.subr.mxu0 0.0
    %457 = vmatpush1.xpose.msra.mxu0 0.0
    %458 = vmatprep.subr.mxu0 0.0
    %459 = vmatpush1.xpose.msra.mxu0 0.0
    %460 = vmatprep.subr.mxu0 0.0
    %461 = vmatpush1.xpose.msra.mxu0 0.0
    %462 = vmatprep.subr.mxu0 0.0
    %463 = vmatpush1.xpose.msra.mxu0 0.0
    %464 = vmatprep.subr.mxu0 0.0
    %465 = vmatpush1.xpose.msra.mxu0 0.0
    %466 = vmatprep.subr.mxu0 0.0
    %467 = vmatpush1.xpose.msra.mxu0 0.0
    %468 = vmatprep.subr.mxu0 0.0
    %469 = vmatpush1.xpose.msra.mxu0 0.0
    %470 = vmatprep.mubr.f32.mxu0 0.0
    %471 = vmatmul.mubr.f32.gmra.mrb[0].mxu0 %v398
    %v472 = vpop.f32.mrb[0].mxu0
    %v473 = vadd.f32 %v188, %v472
    %v474 = vpop.f32.mrb[0].mxu0
    %475 = vmatprep.mubr.f32.mxu0 0.0
    %476 = vmatmul.mubr.f32.gmra.mrb[0].mxu0 %v400
    %v477 = vpop.f32.mrb[0].mxu0
    %v478 = vadd.f32 %v189, %v477
    %v479 = vpop.f32.mrb[0].mxu0
    %480 = vdwg.mxu0
    %v481 = vsel %vm280, %v473, -inf
    %482 = vmax.xlane.f32.xlu0 %v481
    %v483 = vpop.xlane.xlu0 %482
    %v484 = vsel %vm280, %v478, -inf
    %485 = vmax.xlane.f32.xlu0 %v484
    %v486 = vpop.xlane.xlu0 %485
    %v487 = vsub.f32 %v473, %v483
    %v488 = vsub.f32 %v478, %v486
    %v489 = vmul.f32 %v487, 1.442695
    %v490 = vpow.pop %v489
    %v491 = vmul.f32 %v488, 1.442695
    %v492 = vpow.pop %v491
    %v493 = vsel %vm280, %v490, 0.0
    %494 = vadd.xlane.f32.xlu0 %v493
    %v495 = vpop.xlane.xlu0 %494
    %v496 = vsel %vm280, %v492, 0.0
    %497 = vadd.xlane.f32.xlu0 %v496
    %v498 = vpop.xlane.xlu0 %497
    %v499 = vrcp.pop %v495
    %v500 = vrcp.pop %v498
    %v501 = vmul.f32 %v490, %v499
    %v502 = vmul.f32 %v492, %v500
    %503 = vrot.lane.b32.xlu0 %v180, 56
    %v504 = vpop.permute.xlu0 %503
    %505 = vrot.lane.b32.xlu0 %v185, 56
    %v506 = vpop.permute.xlu0 %505
    %v510 = vsel %vm280, %v501, 0
    %v513 = vsel %vm280, %v502, 0
    %515 = vmatprep.subr.mxu0 0.0
    %516 = vmatpush1.msra.mxu0 %v504
    %517 = vmatprep.subr.mxu0 0.0
    %518 = vmatpush1.msra.mxu0 %v506
    %519 = vmatprep.subr.mxu0 0.0
    %520 = vmatpush1.msra.mxu0 0.0
    %521 = vmatprep.subr.mxu0 0.0
    %522 = vmatpush1.msra.mxu0 0.0
    %523 = vmatprep.subr.mxu0 0.0
    %524 = vmatpush1.msra.mxu0 0.0
    %525 = vmatprep.subr.mxu0 0.0
    %526 = vmatpush1.msra.mxu0 0.0
    %527 = vmatprep.subr.mxu0 0.0
    %528 = vmatpush1.msra.mxu0 0.0
    %529 = vmatprep.subr.mxu0 0.0
    %530 = vmatpush1.msra.mxu0 0.0
    %531 = vmatprep.subr.mxu0 0.0
    %532 = vmatpush1.msra.mxu0 0.0
    %533 = vmatprep.subr.mxu0 0.0
    %534 = vmatpush1.msra.mxu0 0.0
    %535 = vmatprep.subr.mxu0 0.0
    %536 = vmatpush1.msra.mxu0 0.0
    %537 = vmatprep.subr.mxu0 0.0
    %538 = vmatpush1.msra.mxu0 0.0
    %539 = vmatprep.subr.mxu0 0.0
    %540 = vmatpush1.msra.mxu0 0.0
    %541 = vmatprep.subr.mxu0 0.0
    %542 = vmatpush1.msra.mxu0 0.0
    %543 = vmatprep.subr.mxu0 0.0
    %544 = vmatpush1.msra.mxu0 0.0
    %545 = vmatprep.subr.mxu0 0.0
    %546 = vmatpush1.msra.mxu0 0.0
    %547 = vmatprep.subr.mxu0 0.0
    %548 = vmatpush1.msra.mxu0 0.0
    %549 = vmatprep.subr.mxu0 0.0
    %550 = vmatpush1.msra.mxu0 0.0
    %551 = vmatprep.subr.mxu0 0.0
    %552 = vmatpush1.msra.mxu0 0.0
    %553 = vmatprep.subr.mxu0 0.0
    %554 = vmatpush1.msra.mxu0 0.0
    %555 = vmatprep.subr.mxu0 0.0
    %556 = vmatpush1.msra.mxu0 0.0
    %557 = vmatprep.subr.mxu0 0.0
    %558 = vmatpush1.msra.mxu0 0.0
    %559 = vmatprep.subr.mxu0 0.0
    %560 = vmatpush1.msra.mxu0 0.0
    %561 = vmatprep.subr.mxu0 0.0
    %562 = vmatpush1.msra.mxu0 0.0
    %563 = vmatprep.subr.mxu0 0.0
    %564 = vmatpush1.msra.mxu0 0.0
    %565 = vmatprep.subr.mxu0 0.0
    %566 = vmatpush1.msra.mxu0 0.0
    %567 = vmatprep.subr.mxu0 0.0
    %568 = vmatpush1.msra.mxu0 0.0
    %569 = vmatprep.subr.mxu0 0.0
    %570 = vmatpush1.msra.mxu0 0.0
    %571 = vmatprep.subr.mxu0 0.0
    %572 = vmatpush1.msra.mxu0 0.0
    %573 = vmatprep.subr.mxu0 0.0
    %574 = vmatpush1.msra.mxu0 0.0
    %575 = vmatprep.subr.mxu0 0.0
    %576 = vmatpush1.msra.mxu0 0.0
    %577 = vmatprep.subr.mxu0 0.0
    %578 = vmatpush1.msra.mxu0 0.0
    %579 = vmatprep.mubr.f32.mxu0 0.0
    %580 = vmatmul.mubr.f32.gmra.mrb[0].mxu0 %v510
    %v581 = vpop.f32.mrb[0].mxu0
    %v582 = vadd.f32 0.0, %v581
    %v583 = vpop.f32.mrb[0].mxu0
    %584 = vmatprep.mubr.f32.mxu0 0.0
    %585 = vmatmul.mubr.f32.gmra.mrb[0].mxu0 %v513
    %v586 = vpop.f32.mrb[0].mxu0
    %v587 = vadd.f32 0.0, %v586
    %v588 = vpop.f32.mrb[0].mxu0
    %589 = vdwg.mxu0
    %590 = vrot.lane.b32.xlu0 %v180, 112
    %v591 = vpop.permute.xlu0 %590
    %592 = vrot.lane.b32.xlu0 %v185, 112
    %v593 = vpop.permute.xlu0 %592
    %594 = vrot.lane.b32.xlu0 %v180, 80
    %v595 = vpop.permute.xlu0 %594
    %596 = vrot.lane.b32.xlu0 %v185, 80
    %v597 = vpop.permute.xlu0 %596
    %v598 = vsel %vm196, %v591, 0
    %v600 = vsel %vm196, %v593, 0
    %v602 = vsel %vm196, %v595, 0
    %v604 = vsel %vm196, %v597, 0
    %606 = vmatprep.subr.mxu0 0.0
    %607 = vmatpush1.xpose.msra.mxu0 %v602
    %608 = vmatprep.subr.mxu0 0.0
    %609 = vmatpush1.xpose.msra.mxu0 %v604
    %610 = vmatprep.subr.mxu0 0.0
    %611 = vmatpush1.xpose.msra.mxu0 0.0
    %612 = vmatprep.subr.mxu0 0.0
    %613 = vmatpush1.xpose.msra.mxu0 0.0
    %614 = vmatprep.subr.mxu0 0.0
    %615 = vmatpush1.xpose.msra.mxu0 0.0
    %616 = vmatprep.subr.mxu0 0.0
    %617 = vmatpush1.xpose.msra.mxu0 0.0
    %618 = vmatprep.subr.mxu0 0.0
    %619 = vmatpush1.xpose.msra.mxu0 0.0
    %620 = vmatprep.subr.mxu0 0.0
    %621 = vmatpush1.xpose.msra.mxu0 0.0
    %622 = vmatprep.subr.mxu0 0.0
    %623 = vmatpush1.xpose.msra.mxu0 0.0
    %624 = vmatprep.subr.mxu0 0.0
    %625 = vmatpush1.xpose.msra.mxu0 0.0
    %626 = vmatprep.subr.mxu0 0.0
    %627 = vmatpush1.xpose.msra.mxu0 0.0
    %628 = vmatprep.subr.mxu0 0.0
    %629 = vmatpush1.xpose.msra.mxu0 0.0
    %630 = vmatprep.subr.mxu0 0.0
    %631 = vmatpush1.xpose.msra.mxu0 0.0
    %632 = vmatprep.subr.mxu0 0.0
    %633 = vmatpush1.xpose.msra.mxu0 0.0
    %634 = vmatprep.subr.mxu0 0.0
    %635 = vmatpush1.xpose.msra.mxu0 0.0
    %636 = vmatprep.subr.mxu0 0.0
    %637 = vmatpush1.xpose.msra.mxu0 0.0
    %638 = vmatprep.subr.mxu0 0.0
    %639 = vmatpush1.xpose.msra.mxu0 0.0
    %640 = vmatprep.subr.mxu0 0.0
    %641 = vmatpush1.xpose.msra.mxu0 0.0
    %642 = vmatprep.subr.mxu0 0.0
    %643 = vmatpush1.xpose.msra.mxu0 0.0
    %644 = vmatprep.subr.mxu0 0.0
    %645 = vmatpush1.xpose.msra.mxu0 0.0
    %646 = vmatprep.subr.mxu0 0.0
    %647 = vmatpush1.xpose.msra.mxu0 0.0
    %648 = vmatprep.subr.mxu0 0.0
    %649 = vmatpush1.xpose.msra.mxu0 0.0
    %650 = vmatprep.subr.mxu0 0.0
    %651 = vmatpush1.xpose.msra.mxu0 0.0
    %652 = vmatprep.subr.mxu0 0.0
    %653 = vmatpush1.xpose.msra.mxu0 0.0
    %654 = vmatprep.subr.mxu0 0.0
    %655 = vmatpush1.xpose.msra.mxu0 0.0
    %656 = vmatprep.subr.mxu0 0.0
    %657 = vmatpush1.xpose.msra.mxu0 0.0
    %658 = vmatprep.subr.mxu0 0.0
    %659 = vmatpush1.xpose.msra.mxu0 0.0
    %660 = vmatprep.subr.mxu0 0.0
    %661 = vmatpush1.xpose.msra.mxu0 0.0
    %662 = vmatprep.subr.mxu0 0.0
    %663 = vmatpush1.xpose.msra.mxu0 0.0
    %664 = vmatprep.subr.mxu0 0.0
    %665 = vmatpush1.xpose.msra.mxu0 0.0
    %666 = vmatprep.subr.mxu0 0.0
    %667 = vmatpush1.xpose.msra.mxu0 0.0
    %668 = vmatprep.subr.mxu0 0.0
    %669 = vmatpush1.xpose.msra.mxu0 0.0
    %670 = vmatprep.mubr.f32.mxu0 0.0
    %671 = vmatmul.mubr.f32.gmra.mrb[0].mxu0 %v598
    %v672 = vpop.f32.mrb[0].mxu0
    %v673 = vadd.f32 %v188, %v672
    %v674 = vpop.f32.mrb[0].mxu0
    %675 = vmatprep.mubr.f32.mxu0 0.0
    %676 = vmatmul.mubr.f32.gmra.mrb[0].mxu0 %v600
    %v677 = vpop.f32.mrb[0].mxu0
    %v678 = vadd.f32 %v189, %v677
    %v679 = vpop.f32.mrb[0].mxu0
    %680 = vdwg.mxu0
    %v681 = vsel %vm280, %v673, -inf
    %682 = vmax.xlane.f32.xlu0 %v681
    %v683 = vpop.xlane.xlu0 %682
    %v684 = vsel %vm280, %v678, -inf
    %685 = vmax.xlane.f32.xlu0 %v684
    %v686 = vpop.xlane.xlu0 %685
    %v687 = vsub.f32 %v673, %v683
    %v688 = vsub.f32 %v678, %v686
    %v689 = vmul.f32 %v687, 1.442695
    %v690 = vpow.pop %v689
    %v691 = vmul.f32 %v688, 1.442695
    %v692 = vpow.pop %v691
    %v693 = vsel %vm280, %v690, 0.0
    %694 = vadd.xlane.f32.xlu0 %v693
    %v695 = vpop.xlane.xlu0 %694
    %v696 = vsel %vm280, %v692, 0.0
    %697 = vadd.xlane.f32.xlu0 %v696
    %v698 = vpop.xlane.xlu0 %697
    %v699 = vrcp.pop %v695
    %v700 = vrcp.pop %v698
    %v701 = vmul.f32 %v690, %v699
    %v702 = vmul.f32 %v692, %v700
    %703 = vrot.lane.b32.xlu0 %v180, 48
    %v704 = vpop.permute.xlu0 %703
    %705 = vrot.lane.b32.xlu0 %v185, 48
    %v706 = vpop.permute.xlu0 %705
    %v710 = vsel %vm280, %v701, 0
    %v713 = vsel %vm280, %v702, 0
    %715 = vmatprep.subr.mxu0 0.0
    %716 = vmatpush1.msra.mxu0 %v704
    %717 = vmatprep.subr.mxu0 0.0
    %718 = vmatpush1.msra.mxu0 %v706
    %719 = vmatprep.subr.mxu0 0.0
    %720 = vmatpush1.msra.mxu0 0.0
    %721 = vmatprep.subr.mxu0 0.0
    %722 = vmatpush1.msra.mxu0 0.0
    %723 = vmatprep.subr.mxu0 0.0
    %724 = vmatpush1.msra.mxu0 0.0
    %725 = vmatprep.subr.mxu0 0.0
    %726 = vmatpush1.msra.mxu0 0.0
    %727 = vmatprep.subr.mxu0 0.0
    %728 = vmatpush1.msra.mxu0 0.0
    %729 = vmatprep.subr.mxu0 0.0
    %730 = vmatpush1.msra.mxu0 0.0
    %731 = vmatprep.subr.mxu0 0.0
    %732 = vmatpush1.msra.mxu0 0.0
    %733 = vmatprep.subr.mxu0 0.0
    %734 = vmatpush1.msra.mxu0 0.0
    %735 = vmatprep.subr.mxu0 0.0
    %736 = vmatpush1.msra.mxu0 0.0
    %737 = vmatprep.subr.mxu0 0.0
    %738 = vmatpush1.msra.mxu0 0.0
    %739 = vmatprep.subr.mxu0 0.0
    %740 = vmatpush1.msra.mxu0 0.0
    %741 = vmatprep.subr.mxu0 0.0
    %742 = vmatpush1.msra.mxu0 0.0
    %743 = vmatprep.subr.mxu0 0.0
    %744 = vmatpush1.msra.mxu0 0.0
    %745 = vmatprep.subr.mxu0 0.0
    %746 = vmatpush1.msra.mxu0 0.0
    %747 = vmatprep.subr.mxu0 0.0
    %748 = vmatpush1.msra.mxu0 0.0
    %749 = vmatprep.subr.mxu0 0.0
    %750 = vmatpush1.msra.mxu0 0.0
    %751 = vmatprep.subr.mxu0 0.0
    %752 = vmatpush1.msra.mxu0 0.0
    %753 = vmatprep.subr.mxu0 0.0
    %754 = vmatpush1.msra.mxu0 0.0
    %755 = vmatprep.subr.mxu0 0.0
    %756 = vmatpush1.msra.mxu0 0.0
    %757 = vmatprep.subr.mxu0 0.0
    %758 = vmatpush1.msra.mxu0 0.0
    %759 = vmatprep.subr.mxu0 0.0
    %760 = vmatpush1.msra.mxu0 0.0
    %761 = vmatprep.subr.mxu0 0.0
    %762 = vmatpush1.msra.mxu0 0.0
    %763 = vmatprep.subr.mxu0 0.0
    %764 = vmatpush1.msra.mxu0 0.0
    %765 = vmatprep.subr.mxu0 0.0
    %766 = vmatpush1.msra.mxu0 0.0
    %767 = vmatprep.subr.mxu0 0.0
    %768 = vmatpush1.msra.mxu0 0.0
    %769 = vmatprep.subr.mxu0 0.0
    %770 = vmatpush1.msra.mxu0 0.0
    %771 = vmatprep.subr.mxu0 0.0
    %772 = vmatpush1.msra.mxu0 0.0
    %773 = vmatprep.subr.mxu0 0.0
    %774 = vmatpush1.msra.mxu0 0.0
    %775 = vmatprep.subr.mxu0 0.0
    %776 = vmatpush1.msra.mxu0 0.0
    %777 = vmatprep.subr.mxu0 0.0
    %778 = vmatpush1.msra.mxu0 0.0
    %779 = vmatprep.mubr.f32.mxu0 0.0
    %780 = vmatmul.mubr.f32.gmra.mrb[0].mxu0 %v710
    %v781 = vpop.f32.mrb[0].mxu0
    %v782 = vadd.f32 0.0, %v781
    %v783 = vpop.f32.mrb[0].mxu0
    %784 = vmatprep.mubr.f32.mxu0 0.0
    %785 = vmatmul.mubr.f32.gmra.mrb[0].mxu0 %v713
    %v786 = vpop.f32.mrb[0].mxu0
    %v787 = vadd.f32 0.0, %v786
    %v788 = vpop.f32.mrb[0].mxu0
    %789 = vdwg.mxu0
    %790 = vrot.lane.b32.xlu0 %v180, 104
    %v791 = vpop.permute.xlu0 %790
    %792 = vrot.lane.b32.xlu0 %v185, 104
    %v793 = vpop.permute.xlu0 %792
    %794 = vrot.lane.b32.xlu0 %v180, 72
    %v795 = vpop.permute.xlu0 %794
    %796 = vrot.lane.b32.xlu0 %v185, 72
    %v797 = vpop.permute.xlu0 %796
    %v798 = vsel %vm196, %v791, 0
    %v800 = vsel %vm196, %v793, 0
    %v802 = vsel %vm196, %v795, 0
    %v804 = vsel %vm196, %v797, 0
    %806 = vmatprep.subr.mxu0 0.0
    %807 = vmatpush1.xpose.msra.mxu0 %v802
    %808 = vmatprep.subr.mxu0 0.0
    %809 = vmatpush1.xpose.msra.mxu0 %v804
    %810 = vmatprep.subr.mxu0 0.0
    %811 = vmatpush1.xpose.msra.mxu0 0.0
    %812 = vmatprep.subr.mxu0 0.0
    %813 = vmatpush1.xpose.msra.mxu0 0.0
    %814 = vmatprep.subr.mxu0 0.0
    %815 = vmatpush1.xpose.msra.mxu0 0.0
    %816 = vmatprep.subr.mxu0 0.0
    %817 = vmatpush1.xpose.msra.mxu0 0.0
    %818 = vmatprep.subr.mxu0 0.0
    %819 = vmatpush1.xpose.msra.mxu0 0.0
    %820 = vmatprep.subr.mxu0 0.0
    %821 = vmatpush1.xpose.msra.mxu0 0.0
    %822 = vmatprep.subr.mxu0 0.0
    %823 = vmatpush1.xpose.msra.mxu0 0.0
    %824 = vmatprep.subr.mxu0 0.0
    %825 = vmatpush1.xpose.msra.mxu0 0.0
    %826 = vmatprep.subr.mxu0 0.0
    %827 = vmatpush1.xpose.msra.mxu0 0.0
    %828 = vmatprep.subr.mxu0 0.0
    %829 = vmatpush1.xpose.msra.mxu0 0.0
    %830 = vmatprep.subr.mxu0 0.0
    %831 = vmatpush1.xpose.msra.mxu0 0.0
    %832 = vmatprep.subr.mxu0 0.0
    %833 = vmatpush1.xpose.msra.mxu0 0.0
    %834 = vmatprep.subr.mxu0 0.0
    %835 = vmatpush1.xpose.msra.mxu0 0.0
    %836 = vmatprep.subr.mxu0 0.0
    %837 = vmatpush1.xpose.msra.mxu0 0.0
    %838 = vmatprep.subr.mxu0 0.0
    %839 = vmatpush1.xpose.msra.mxu0 0.0
    %840 = vmatprep.subr.mxu0 0.0
    %841 = vmatpush1.xpose.msra.mxu0 0.0
    %842 = vmatprep.subr.mxu0 0.0
    %843 = vmatpush1.xpose.msra.mxu0 0.0
    %844 = vmatprep.subr.mxu0 0.0
    %845 = vmatpush1.xpose.msra.mxu0 0.0
    %846 = vmatprep.subr.mxu0 0.0
    %847 = vmatpush1.xpose.msra.mxu0 0.0
    %848 = vmatprep.subr.mxu0 0.0
    %849 = vmatpush1.xpose.msra.mxu0 0.0
    %850 = vmatprep.subr.mxu0 0.0
    %851 = vmatpush1.xpose.msra.mxu0 0.0
    %852 = vmatprep.subr.mxu0 0.0
    %853 = vmatpush1.xpose.msra.mxu0 0.0
    %854 = vmatprep.subr.mxu0 0.0
    %855 = vmatpush1.xpose.msra.mxu0 0.0
    %856 = vmatprep.subr.mxu0 0.0
    %857 = vmatpush1.xpose.msra.mxu0 0.0
    %858 = vmatprep.subr.mxu0 0.0
    %859 = vmatpush1.xpose.msra.mxu0 0.0
    %860 = vmatprep.subr.mxu0 0.0
    %861 = vmatpush1.xpose.msra.mxu0 0.0
    %862 = vmatprep.subr.mxu0 0.0
    %863 = vmatpush1.xpose.msra.mxu0 0.0
    %864 = vmatprep.subr.mxu0 0.0
    %865 = vmatpush1.xpose.msra.mxu0 0.0
    %866 = vmatprep.subr.mxu0 0.0
    %867 = vmatpush1.xpose.msra.mxu0 0.0
    %868 = vmatprep.subr.mxu0 0.0
    %869 = vmatpush1.xpose.msra.mxu0 0.0
    %870 = vmatprep.mubr.f32.mxu0 0.0
    %871 = vmatmul.mubr.f32.gmra.mrb[0].mxu0 %v798
    %v872 = vpop.f32.mrb[0].mxu0
    %v873 = vadd.f32 %v188, %v872
    %v874 = vpop.f32.mrb[0].mxu0
    %875 = vmatprep.mubr.f32.mxu0 0.0
    %876 = vmatmul.mubr.f32.gmra.mrb[0].mxu0 %v800
    %v877 = vpop.f32.mrb[0].mxu0
    %v878 = vadd.f32 %v189, %v877
    %v879 = vpop.f32.mrb[0].mxu0
    %880 = vdwg.mxu0
    %v881 = vsel %vm280, %v873, -inf
    %882 = vmax.xlane.f32.xlu0 %v881
    %v883 = vpop.xlane.xlu0 %882
    %v884 = vsel %vm280, %v878, -inf
    %885 = vmax.xlane.f32.xlu0 %v884
    %v886 = vpop.xlane.xlu0 %885
    %v887 = vsub.f32 %v873, %v883
    %v888 = vsub.f32 %v878, %v886
    %v889 = vmul.f32 %v887, 1.442695
    %v890 = vpow.pop %v889
    %v891 = vmul.f32 %v888, 1.442695
    %v892 = vpow.pop %v891
    %v893 = vsel %vm280, %v890, 0.0
    %894 = vadd.xlane.f32.xlu0 %v893
    %v895 = vpop.xlane.xlu0 %894
    %v896 = vsel %vm280, %v892, 0.0
    %897 = vadd.xlane.f32.xlu0 %v896
    %v898 = vpop.xlane.xlu0 %897
    %v899 = vrcp.pop %v895
    %v900 = vrcp.pop %v898
    %v901 = vmul.f32 %v890, %v899
    %v902 = vmul.f32 %v892, %v900
    %903 = vrot.lane.b32.xlu0 %v180, 40
    %v904 = vpop.permute.xlu0 %903
    %905 = vrot.lane.b32.xlu0 %v185, 40
    %v906 = vpop.permute.xlu0 %905
    %v910 = vsel %vm280, %v901, 0
    %v913 = vsel %vm280, %v902, 0
    %915 = vmatprep.subr.mxu0 0.0
    %916 = vmatpush1.msra.mxu0 %v904
    %917 = vmatprep.subr.mxu0 0.0
    %918 = vmatpush1.msra.mxu0 %v906
    %919 = vmatprep.subr.mxu0 0.0
    %920 = vmatpush1.msra.mxu0 0.0
    %921 = vmatprep.subr.mxu0 0.0
    %922 = vmatpush1.msra.mxu0 0.0
    %923 = vmatprep.subr.mxu0 0.0
    %924 = vmatpush1.msra.mxu0 0.0
    %925 = vmatprep.subr.mxu0 0.0
    %926 = vmatpush1.msra.mxu0 0.0
    %927 = vmatprep.subr.mxu0 0.0
    %928 = vmatpush1.msra.mxu0 0.0
    %929 = vmatprep.subr.mxu0 0.0
    %930 = vmatpush1.msra.mxu0 0.0
    %931 = vmatprep.subr.mxu0 0.0
    %932 = vmatpush1.msra.mxu0 0.0
    %933 = vmatprep.subr.mxu0 0.0
    %934 = vmatpush1.msra.mxu0 0.0
    %935 = vmatprep.subr.mxu0 0.0
    %936 = vmatpush1.msra.mxu0 0.0
    %937 = vmatprep.subr.mxu0 0.0
    %938 = vmatpush1.msra.mxu0 0.0
    %939 = vmatprep.subr.mxu0 0.0
    %940 = vmatpush1.msra.mxu0 0.0
    %941 = vmatprep.subr.mxu0 0.0
    %942 = vmatpush1.msra.mxu0 0.0
    %943 = vmatprep.subr.mxu0 0.0
    %944 = vmatpush1.msra.mxu0 0.0
    %945 = vmatprep.subr.mxu0 0.0
    %946 = vmatpush1.msra.mxu0 0.0
    %947 = vmatprep.subr.mxu0 0.0
    %948 = vmatpush1.msra.mxu0 0.0
    %949 = vmatprep.subr.mxu0 0.0
    %950 = vmatpush1.msra.mxu0 0.0
    %951 = vmatprep.subr.mxu0 0.0
    %952 = vmatpush1.msra.mxu0 0.0
    %953 = vmatprep.subr.mxu0 0.0
    %954 = vmatpush1.msra.mxu0 0.0
    %955 = vmatprep.subr.mxu0 0.0
    %956 = vmatpush1.msra.mxu0 0.0
    %957 = vmatprep.subr.mxu0 0.0
    %958 = vmatpush1.msra.mxu0 0.0
    %959 = vmatprep.subr.mxu0 0.0
    %960 = vmatpush1.msra.mxu0 0.0
    %961 = vmatprep.subr.mxu0 0.0
    %962 = vmatpush1.msra.mxu0 0.0
    %963 = vmatprep.subr.mxu0 0.0
    %964 = vmatpush1.msra.mxu0 0.0
    %965 = vmatprep.subr.mxu0 0.0
    %966 = vmatpush1.msra.mxu0 0.0
    %967 = vmatprep.subr.mxu0 0.0
    %968 = vmatpush1.msra.mxu0 0.0
    %969 = vmatprep.subr.mxu0 0.0
    %970 = vmatpush1.msra.mxu0 0.0
    %971 = vmatprep.subr.mxu0 0.0
    %972 = vmatpush1.msra.mxu0 0.0
    %973 = vmatprep.subr.mxu0 0.0
    %974 = vmatpush1.msra.mxu0 0.0
    %975 = vmatprep.subr.mxu0 0.0
    %976 = vmatpush1.msra.mxu0 0.0
    %977 = vmatprep.subr.mxu0 0.0
    %978 = vmatpush1.msra.mxu0 0.0
    %979 = vmatprep.mubr.f32.mxu0 0.0
    %980 = vmatmul.mubr.f32.gmra.mrb[0].mxu0 %v910
    %v981 = vpop.f32.mrb[0].mxu0
    %v982 = vadd.f32 0.0, %v981
    %v983 = vpop.f32.mrb[0].mxu0
    %984 = vmatprep.mubr.f32.mxu0 0.0
    %985 = vmatmul.mubr.f32.gmra.mrb[0].mxu0 %v913
    %v986 = vpop.f32.mrb[0].mxu0
    %v987 = vadd.f32 0.0, %v986
    %v988 = vpop.f32.mrb[0].mxu0
    %989 = vdwg.mxu0
    %992 = vrot.lane.b32.xlu0 %v582, 8
    %v993 = vpop.permute.xlu0 %992
    %994 = vrot.lane.b32.xlu0 %v587, 8
    %v995 = vpop.permute.xlu0 %994
    %1000 = vrot.lane.b32.xlu0 %v782, 16
    %v1001 = vpop.permute.xlu0 %1000
    %1002 = vrot.lane.b32.xlu0 %v787, 16
    %v1003 = vpop.permute.xlu0 %1002
    %1008 = vrot.lane.b32.xlu0 %v982, 24
    %v1009 = vpop.permute.xlu0 %1008
    %1010 = vrot.lane.b32.xlu0 %v987, 24
    %v1011 = vpop.permute.xlu0 %1010
    %v1014 = vsel %vm196, %v382, %v993
    %v1015 = vsel %vm196, %v387, %v995
    %v1016 = vsel %vm280, %v1014, %v1001
    %v1017 = vsel %vm280, %v1015, %v1003
    %vm1018 = vcmask 195584
    %v1019 = vsel %vm1018, %v1016, %v1009
    %v1020 = vsel %vm1018, %v1017, %v1011
    %v1021 = vld [vmem:[%s6] sm:$0xff]
    %v1022 = vld [vmem:[%s6 + $0x8] sm:$0xff]
    %v1023 = vld [vmem:[%s6 + $0x10] sm:$0xff]
    %v1024 = vld [vmem:[%s6 + $0x18] sm:$0xff]
    %v1026 = vsel %vm52, %v1019, 0
    %v1029 = vsel %vm52, %v1020, 0
    %1031 = vmatprep.subr.mxu0 0.0
    %1032 = vmatpush1.msra.mxu0 %v1021
    %1033 = vmatprep.subr.mxu0 0.0
    %1034 = vmatpush1.msra.mxu0 %v1022
    %1035 = vmatprep.subr.mxu0 0.0
    %1036 = vmatpush1.msra.mxu0 %v1023
    %1037 = vmatprep.subr.mxu0 0.0
    %1038 = vmatpush1.msra.mxu0 %v1024
    %1039 = vmatprep.subr.mxu0 0.0
    %1040 = vmatpush1.msra.mxu0 0.0
    %1041 = vmatprep.subr.mxu0 0.0
    %1042 = vmatpush1.msra.mxu0 0.0
    %1043 = vmatprep.subr.mxu0 0.0
    %1044 = vmatpush1.msra.mxu0 0.0
    %1045 = vmatprep.subr.mxu0 0.0
    %1046 = vmatpush1.msra.mxu0 0.0
    %1047 = vmatprep.subr.mxu0 0.0
    %1048 = vmatpush1.msra.mxu0 0.0
    %1049 = vmatprep.subr.mxu0 0.0
    %1050 = vmatpush1.msra.mxu0 0.0
    %1051 = vmatprep.subr.mxu0 0.0
    %1052 = vmatpush1.msra.mxu0 0.0
    %1053 = vmatprep.subr.mxu0 0.0
    %1054 = vmatpush1.msra.mxu0 0.0
    %1055 = vmatprep.subr.mxu0 0.0
    %1056 = vmatpush1.msra.mxu0 0.0
    %1057 = vmatprep.subr.mxu0 0.0
    %1058 = vmatpush1.msra.mxu0 0.0
    %1059 = vmatprep.subr.mxu0 0.0
    %1060 = vmatpush1.msra.mxu0 0.0
    %1061 = vmatprep.subr.mxu0 0.0
    %1062 = vmatpush1.msra.mxu0 0.0
    %1063 = vmatprep.subr.mxu0 0.0
    %1064 = vmatpush1.msra.mxu0 0.0
    %1065 = vmatprep.subr.mxu0 0.0
    %1066 = vmatpush1.msra.mxu0 0.0
    %1067 = vmatprep.subr.mxu0 0.0
    %1068 = vmatpush1.msra.mxu0 0.0
    %1069 = vmatprep.subr.mxu0 0.0
    %1070 = vmatpush1.msra.mxu0 0.0
    %1071 = vmatprep.subr.mxu0 0.0
    %1072 = vmatpush1.msra.mxu0 0.0
    %1073 = vmatprep.subr.mxu0 0.0
    %1074 = vmatpush1.msra.mxu0 0.0
    %1075 = vmatprep.subr.mxu0 0.0
    %1076 = vmatpush1.msra.mxu0 0.0
    %1077 = vmatprep.subr.mxu0 0.0
    %1078 = vmatpush1.msra.mxu0 0.0
    %1079 = vmatprep.subr.mxu0 0.0
    %1080 = vmatpush1.msra.mxu0 0.0
    %1081 = vmatprep.subr.mxu0 0.0
    %1082 = vmatpush1.msra.mxu0 0.0
    %1083 = vmatprep.subr.mxu0 0.0
    %1084 = vmatpush1.msra.mxu0 0.0
    %1085 = vmatprep.subr.mxu0 0.0
    %1086 = vmatpush1.msra.mxu0 0.0
    %1087 = vmatprep.subr.mxu0 0.0
    %1088 = vmatpush1.msra.mxu0 0.0
    %1089 = vmatprep.subr.mxu0 0.0
    %1090 = vmatpush1.msra.mxu0 0.0
    %1091 = vmatprep.subr.mxu0 0.0
    %1092 = vmatpush1.msra.mxu0 0.0
    %1093 = vmatprep.subr.mxu0 0.0
    %1094 = vmatpush1.msra.mxu0 0.0
    %1095 = vmatprep.mubr.f32.mxu0 0.0
    %1096 = vmatmul.mubr.f32.gmra.mrb[0].mxu0 %v1026
    %v1097 = vpop.f32.mrb[0].mxu0
    %v1098 = vadd.f32 0.0, %v1097
    %v1099 = vpop.f32.mrb[0].mxu0
    %1100 = vmatprep.mubr.f32.mxu0 0.0
    %1101 = vmatmul.mubr.f32.gmra.mrb[0].mxu0 %v1029
    %v1102 = vpop.f32.mrb[0].mxu0
    %v1103 = vadd.f32 0.0, %v1102
    %v1104 = vpop.f32.mrb[0].mxu0
    %1105 = vdwg.mxu0
    %v1106 = vadd.f32 %v48, %v1098
    %v1107 = vadd.f32 %v49, %v1103
    %v1108 = vld [vmem:[%s7] sm:$0x1]
    %v1110 = vlaneseq
    %v1111 = vshrl.u32 %v1110, 7
    %v1112 = vsub.s32 0, %v1111
    %v1113 = vrot.slane %v1108, %v1112
    %v1115 = vadd.f32 %v1106, %v1113
    %v1116 = vadd.f32 %v1107, %v1113
    %v1117 = vld [vmem:[%s8] sm:$0x1]
    %v1118 = vld [vmem:[%s9] sm:$0x1]
    %v1119 = vsel %vm52, %v1115, 0.0
    %1120 = vadd.xlane.f32.xlu0 %v1119
    %v1121 = vpop.xlane.xlu0 %1120
    %v1122 = vsel %vm52, %v1116, 0.0
    %1123 = vadd.xlane.f32.xlu0 %v1122
    %v1124 = vpop.xlane.xlu0 %1123
    %v1125 = vmul.f32 %v1121, %v59
    %v1126 = vmul.f32 %v1124, %v59
    %v1127 = vsub.f32 %v1115, %v1125
    %v1128 = vsub.f32 %v1116, %v1126
    %v1129 = vmul.f32 %v1127, %v1127
    %v1130 = vmul.f32 %v1128, %v1128
    %v1131 = vsel %vm52, %v1129, 0.0
    %1132 = vadd.xlane.f32.xlu0 %v1131
    %v1133 = vpop.xlane.xlu0 %1132
    %v1134 = vsel %vm52, %v1130, 0.0
    %1135 = vadd.xlane.f32.xlu0 %v1134
    %v1136 = vpop.xlane.xlu0 %1135
    %v1137 = vmul.f32 %v1133, %v59
    %v1138 = vmul.f32 %v1136, %v59
    %v1139 = vadd.f32 %v1137, 1e-05
    %v1140 = vadd.f32 %v1138, 1e-05
    %v1141 = vrsqrt.pop %v1139
    %v1142 = vrsqrt.pop %v1140
    %v1143 = vmul.f32 %v1127, %v1141
    %v1144 = vmul.f32 %v1128, %v1142
    %v1146 = vlaneseq
    %v1147 = vshrl.u32 %v1146, 7
    %v1148 = vsub.s32 0, %v1147
    %v1149 = vrot.slane %v1117, %v1148
    %v1151 = vmul.f32 %v1143, %v1149
    %v1152 = vmul.f32 %v1144, %v1149
    %v1154 = vlaneseq
    %v1155 = vshrl.u32 %v1154, 7
    %v1156 = vsub.s32 0, %v1155
    %v1157 = vrot.slane %v1118, %v1156
    %v1159 = vadd.f32 %v1151, %v1157
    %v1160 = vadd.f32 %v1152, %v1157
    %v1161 = vld [vmem:[%s10] sm:$0xff]
    %v1162 = vld [vmem:[%s10 + $0x8] sm:$0xff]
    %v1163 = vld [vmem:[%s10 + $0x10] sm:$0xff]
    %v1164 = vld [vmem:[%s10 + $0x18] sm:$0xff]
    %v1165 = vld [vmem:[%s11] sm:$0x1]
    %v1167 = vlaneseq
    %v1168 = vshrl.u32 %v1167, 7
    %v1169 = vsub.s32 0, %v1168
    %v1170 = vrot.slane %v1165, %v1169
    %v1173 = vsel %vm52, %v1159, 0
    %v1176 = vsel %vm52, %v1160, 0
    %1178 = vmatprep.subr.mxu0 0.0
    %1179 = vmatpush1.msra.mxu0 %v1161
    %1180 = vmatprep.subr.mxu0 0.0
    %1181 = vmatpush1.msra.mxu0 %v1162
    %1182 = vmatprep.subr.mxu0 0.0
    %1183 = vmatpush1.msra.mxu0 %v1163
    %1184 = vmatprep.subr.mxu0 0.0
    %1185 = vmatpush1.msra.mxu0 %v1164
    %1186 = vmatprep.subr.mxu0 0.0
    %1187 = vmatpush1.msra.mxu0 0.0
    %1188 = vmatprep.subr.mxu0 0.0
    %1189 = vmatpush1.msra.mxu0 0.0
    %1190 = vmatprep.subr.mxu0 0.0
    %1191 = vmatpush1.msra.mxu0 0.0
    %1192 = vmatprep.subr.mxu0 0.0
    %1193 = vmatpush1.msra.mxu0 0.0
    %1194 = vmatprep.subr.mxu0 0.0
    %1195 = vmatpush1.msra.mxu0 0.0
    %1196 = vmatprep.subr.mxu0 0.0
    %1197 = vmatpush1.msra.mxu0 0.0
    %1198 = vmatprep.subr.mxu0 0.0
    %1199 = vmatpush1.msra.mxu0 0.0
    %1200 = vmatprep.subr.mxu0 0.0
    %1201 = vmatpush1.msra.mxu0 0.0
    %1202 = vmatprep.subr.mxu0 0.0
    %1203 = vmatpush1.msra.mxu0 0.0
    %1204 = vmatprep.subr.mxu0 0.0
    %1205 = vmatpush1.msra.mxu0 0.0
    %1206 = vmatprep.subr.mxu0 0.0
    %1207 = vmatpush1.msra.mxu0 0.0
    %1208 = vmatprep.subr.mxu0 0.0
    %1209 = vmatpush1.msra.mxu0 0.0
    %1210 = vmatprep.subr.mxu0 0.0
    %1211 = vmatpush1.msra.mxu0 0.0
    %1212 = vmatprep.subr.mxu0 0.0
    %1213 = vmatpush1.msra.mxu0 0.0
    %1214 = vmatprep.subr.mxu0 0.0
    %1215 = vmatpush1.msra.mxu0 0.0
    %1216 = vmatprep.subr.mxu0 0.0
    %1217 = vmatpush1.msra.mxu0 0.0
    %1218 = vmatprep.subr.mxu0 0.0
    %1219 = vmatpush1.msra.mxu0 0.0
    %1220 = vmatprep.subr.mxu0 0.0
    %1221 = vmatpush1.msra.mxu0 0.0
    %1222 = vmatprep.subr.mxu0 0.0
    %1223 = vmatpush1.msra.mxu0 0.0
    %1224 = vmatprep.subr.mxu0 0.0
    %1225 = vmatpush1.msra.mxu0 0.0
    %1226 = vmatprep.subr.mxu0 0.0
    %1227 = vmatpush1.msra.mxu0 0.0
    %1228 = vmatprep.subr.mxu0 0.0
    %1229 = vmatpush1.msra.mxu0 0.0
    %1230 = vmatprep.subr.mxu0 0.0
    %1231 = vmatpush1.msra.mxu0 0.0
    %1232 = vmatprep.subr.mxu0 0.0
    %1233 = vmatpush1.msra.mxu0 0.0
    %1234 = vmatprep.subr.mxu0 0.0
    %1235 = vmatpush1.msra.mxu0 0.0
    %1236 = vmatprep.subr.mxu0 0.0
    %1237 = vmatpush1.msra.mxu0 0.0
    %1238 = vmatprep.subr.mxu0 0.0
    %1239 = vmatpush1.msra.mxu0 0.0
    %1240 = vmatprep.subr.mxu0 0.0
    %1241 = vmatpush1.msra.mxu0 0.0
    %1242 = vmatprep.mubr.f32.mxu0 0.0
    %1243 = vmatmul.mubr.f32.gmra.mrb[0].mxu0 %v1173
    %v1244 = vpop.f32.mrb[0].mxu0
    %v1245 = vadd.f32 %v1170, %v1244
    %v1246 = vpop.f32.mrb[0].mxu0
    %1247 = vmatprep.mubr.f32.mxu0 0.0
    %1248 = vmatmul.mubr.f32.gmra.mrb[0].mxu0 %v1176
    %v1249 = vpop.f32.mrb[0].mxu0
    %v1250 = vadd.f32 %v1170, %v1249
    %v1251 = vpop.f32.mrb[0].mxu0
    %1252 = vdwg.mxu0
    %v1253 = vmul.f32 %v1245, 0.5
    %v1254 = vmul.f32 %v1250, 0.5
    %v1255 = vmul.f32 %v1245, 0.044715
    %v1256 = vmul.f32 %v1250, 0.044715
    %v1257 = vmul.f32 %v1255, %v1245
    %v1258 = vmul.f32 %v1256, %v1250
    %v1259 = vmul.f32 %v1257, %v1245
    %v1260 = vmul.f32 %v1258, %v1250
    %v1261 = vadd.f32 %v1245, %v1259
    %v1262 = vadd.f32 %v1250, %v1260
    %v1263 = vmul.f32 %v1261, 0.7978846
    %v1264 = vmul.f32 %v1262, 0.7978846
    %v1265 = vtanh.pop %v1263
    %v1266 = vtanh.pop %v1264
    %v1267 = vadd.f32 %v1265, 1.0
    %v1268 = vadd.f32 %v1266, 1.0
    %v1269 = vmul.f32 %v1253, %v1267
    %v1270 = vmul.f32 %v1254, %v1268
    %v1271 = vld [vmem:[%s12] sm:$0xff]
    %v1272 = vld [vmem:[%s12 + $0x8] sm:$0xff]
    %v1273 = vld [vmem:[%s12 + $0x10] sm:$0xff]
    %v1274 = vld [vmem:[%s12 + $0x18] sm:$0xff]
    %v1275 = vld [vmem:[%s12 + $0x20] sm:$0xff]
    %v1276 = vld [vmem:[%s12 + $0x28] sm:$0xff]
    %v1277 = vld [vmem:[%s12 + $0x30] sm:$0xff]
    %v1278 = vld [vmem:[%s12 + $0x38] sm:$0xff]
    %v1279 = vld [vmem:[%s12 + $0x40] sm:$0xff]
    %v1280 = vld [vmem:[%s12 + $0x48] sm:$0xff]
    %v1281 = vld [vmem:[%s12 + $0x50] sm:$0xff]
    %v1282 = vld [vmem:[%s12 + $0x58] sm:$0xff]
    %v1283 = vld [vmem:[%s12 + $0x60] sm:$0xff]
    %v1284 = vld [vmem:[%s12 + $0x68] sm:$0xff]
    %v1285 = vld [vmem:[%s12 + $0x70] sm:$0xff]
    %v1286 = vld [vmem:[%s12 + $0x78] sm:$0xff]
    %v1287 = vld [vmem:[%s13] sm:$0x1]
    %v1289 = vlaneseq
    %v1290 = vshrl.u32 %v1289, 7
    %v1291 = vsub.s32 0, %v1290
    %v1292 = vrot.slane %v1287, %v1291
    %1294 = vmatprep.subr.mxu0 0.0
    %1295 = vmatpush1.msra.mxu0 %v1271
    %1296 = vmatprep.subr.mxu0 0.0
    %1297 = vmatpush1.msra.mxu0 %v1272
    %1298 = vmatprep.subr.mxu0 0.0
    %1299 = vmatpush1.msra.mxu0 %v1273
    %1300 = vmatprep.subr.mxu0 0.0
    %1301 = vmatpush1.msra.mxu0 %v1274
    %1302 = vmatprep.subr.mxu0 0.0
    %1303 = vmatpush1.msra.mxu0 %v1275
    %1304 = vmatprep.subr.mxu0 0.0
    %1305 = vmatpush1.msra.mxu0 %v1276
    %1306 = vmatprep.subr.mxu0 0.0
    %1307 = vmatpush1.msra.mxu0 %v1277
    %1308 = vmatprep.subr.mxu0 0.0
    %1309 = vmatpush1.msra.mxu0 %v1278
    %1310 = vmatprep.subr.mxu0 0.0
    %1311 = vmatpush1.msra.mxu0 %v1279
    %1312 = vmatprep.subr.mxu0 0.0
    %1313 = vmatpush1.msra.mxu0 %v1280
    %1314 = vmatprep.subr.mxu0 0.0
    %1315 = vmatpush1.msra.mxu0 %v1281
    %1316 = vmatprep.subr.mxu0 0.0
    %1317 = vmatpush1.msra.mxu0 %v1282
    %1318 = vmatprep.subr.mxu0 0.0
    %1319 = vmatpush1.msra.mxu0 %v1283
    %1320 = vmatprep.subr.mxu0 0.0
    %1321 = vmatpush1.msra.mxu0 %v1284
    %1322 = vmatprep.subr.mxu0 0.0
    %1323 = vmatpush1.msra.mxu0 %v1285
    %1324 = vmatprep.subr.mxu0 0.0
    %1325 = vmatpush1.msra.mxu0 %v1286
    %1326 = vmatprep.subr.mxu0 0.0
    %1327 = vmatpush1.msra.mxu0 0.0
    %1328 = vmatprep.subr.mxu0 0.0
    %1329 = vmatpush1.msra.mxu0 0.0
    %1330 = vmatprep.subr.mxu0 0.0
    %1331 = vmatpush1.msra.mxu0 0.0
    %1332 = vmatprep.subr.mxu0 0.0
    %1333 = vmatpush1.msra.mxu0 0.0
    %1334 = vmatprep.subr.mxu0 0.0
    %1335 = vmatpush1.msra.mxu0 0.0
    %1336 = vmatprep.subr.mxu0 0.0
    %1337 = vmatpush1.msra.mxu0 0.0
    %1338 = vmatprep.subr.mxu0 0.0
    %1339 = vmatpush1.msra.mxu0 0.0
    %1340 = vmatprep.subr.mxu0 0.0
    %1341 = vmatpush1.msra.mxu0 0.0
    %1342 = vmatprep.subr.mxu0 0.0
    %1343 = vmatpush1.msra.mxu0 0.0
    %1344 = vmatprep.subr.mxu0 0.0
    %1345 = vmatpush1.msra.mxu0 0.0
    %1346 = vmatprep.subr.mxu0 0.0
    %1347 = vmatpush1.msra.mxu0 0.0
    %1348 = vmatprep.subr.mxu0 0.0
    %1349 = vmatpush1.msra.mxu0 0.0
    %1350 = vmatprep.subr.mxu0 0.0
    %1351 = vmatpush1.msra.mxu0 0.0
    %1352 = vmatprep.subr.mxu0 0.0
    %1353 = vmatpush1.msra.mxu0 0.0
    %1354 = vmatprep.subr.mxu0 0.0
    %1355 = vmatpush1.msra.mxu0 0.0
    %1356 = vmatprep.subr.mxu0 0.0
    %1357 = vmatpush1.msra.mxu0 0.0
    %1358 = vmatprep.mubr.f32.mxu0 0.0
    %1359 = vmatmul.mubr.f32.gmra.mrb[0].mxu0 %v1269
    %v1360 = vpop.f32.mrb[0].mxu0
    %v1361 = vadd.f32 %v1292, %v1360
    %v1362 = vpop.f32.mrb[0].mxu0
    %1363 = vmatprep.mubr.f32.mxu0 0.0
    %1364 = vmatmul.mubr.f32.gmra.mrb[0].mxu0 %v1270
    %v1365 = vpop.f32.mrb[0].mxu0
    %v1366 = vadd.f32 %v1292, %v1365
    %v1367 = vpop.f32.mrb[0].mxu0
    %1368 = vdwg.mxu0
    %v1369 = vadd.f32 %v1115, %v1361
    %v1370 = vadd.f32 %v1116, %v1366
    %1371 = vst.msk [vmem:[#allocation2] sm:$0xff] %vm52, %v1369
    %1372 = vst.msk [vmem:[#allocation2 + $0x8] sm:$0xff] %vm52, %v1370
    // Predicated region
    $region58: #{gpt_block.1} parent=1 // pred_check
      _
    $region59: #{gpt_block.1} parent=1 // pred_check_branch
      %1374 = sbr.rel (0) target = $region61
    $region60: #{gpt_block.1} parent=1 // pred_region
      %s1376 = ssub.s32 256, 256
      %1377 = vsyncadd [#allocation3], %s1376
      %s1378 = sshll.u32 [#allocation2], 4
      %s1379 = int_to_ptr.vmem [resolvable:$true] %s1378
      %1384 = dma.vmem_to_hbm [thread:$0]  %s1379, 256, %s14, [#allocation3], 128, 128, 8
    $region61: #{gpt_block.1} parent=1 // pred_fallthru
      _
    // Predicated region
    $region62: #{gpt_block.1} parent=1 // pred_check
      _
    $region63: #{gpt_block.1} parent=1 // pred_check_branch
      %1386 = sbr.rel (0) target = $region65
    $region64: #{gpt_block.1} parent=1 // pred_region
      %1387 = dma.done [#allocation3], 256
    $region65: #{gpt_block.1} parent=1 // pred_fallthru
      _
    %1388 = vsyncpa [#allocation3], 1

</llo_original>
